<compile_context>
chip_gen: v7x
topology: tpu7x:2x2x1
jax: 0.10.0
libtpu: 0.0.40
codegen_flags: <defaults>
</compile_context>

<pallas_src>
import jax
import jax.numpy as jnp
from jax import lax
from jax.experimental import pallas as pl
from jax.experimental.pallas import tpu as pltpu

T = 8          # sequence length
B = 2          # batch
C = 32         # encoder_embed_dim
H = 4          # encoder_attention_heads
D = C // H     # head dim
F = 64         # encoder_ffn_embed_dim
EPS = 1e-5
SCALE = D ** -0.5
NEG = -1e9     # large finite negative instead of -inf (no NaN on fully-masked rows)

LANES = 128
TRANS_B = (((1,), (1,)), ((), ()))   # contract last dims of both operands: A @ B.T on MXU

# Row indices inside the packed (VROWS, 128) parameter slab (one param per row,
# always read at lane offset 0 -> sublane slices only, no lane rotates).
ROW_BQ = 0              # rows 0..H-1    : per-head q bias   (lanes 0:D)
ROW_BK = H              # rows H..2H-1   : per-head k bias
ROW_BV = 2 * H          # rows 2H..3H-1  : per-head v bias
ROW_BO = 3 * H          # out-proj bias                      (lanes 0:C)
ROW_LN1_G = ROW_BO + 1
ROW_LN1_B = ROW_BO + 2
ROW_B1 = ROW_BO + 3     # fc1 bias                           (lanes 0:F)
ROW_B2 = ROW_BO + 4     # fc2 bias                           (lanes 0:C)
ROW_LN2_G = ROW_BO + 5
ROW_LN2_B = ROW_BO + 6
VROWS = ((ROW_LN2_B + 1 + 7) // 8) * 8   # pad row count to a sublane multiple (=24)


def _layer_norm(x, g, b):
    # One stacked cross-lane reduce computes mean(x) and mean(x*x) together;
    # var = E[x^2] - mu^2 (saves an XLU reduction vs. the two-pass form).
    n = x.shape[0]
    s = jnp.mean(jnp.concatenate([x, x * x], axis=0), axis=-1, keepdims=True)  # (2n, 1)
    mu = s[:n]
    var = jnp.maximum(s[n:] - mu * mu, 0.0)
    return (x - mu) * lax.rsqrt(var + EPS) * g + b


def encoder_layer_kernel(pad_ref, x_ref, wqkv_t_ref, wo_ref, w1_ref, w2_ref,
                         vec_ref, out_ref):
    x = x_ref[0]                                              # (T, C) f32
    # additive key-padding mask built in-kernel from the raw int mask row
    amask = jnp.where(pad_ref[0] != 0, NEG, 0.0).astype(jnp.float32)   # (1, T)

    vec = vec_ref[...]                                        # (VROWS, 128)
    wqkv_t = wqkv_t_ref[...]                                  # (3C, C) = [Wq^T; Wk^T; Wv^T]
    wo = wo_ref[...]                                          # (C, C)

    # ---------------- self attention ----------------
    residual = x
    scores, vals = [], []
    for h in range(H):                    # unrolled; every slice below is a sublane slice
        wq_h = wqkv_t[h * D:(h + 1) * D, :]                    # (D, C) == Wq[:, head h].T
        wk_h = wqkv_t[C + h * D:C + (h + 1) * D, :]
        wv_h = wqkv_t[2 * C + h * D:2 * C + (h + 1) * D, :]
        q_h = (lax.dot_general(x, wq_h, TRANS_B, preferred_element_type=jnp.float32)
               + vec[ROW_BQ + h:ROW_BQ + h + 1, 0:D]) * SCALE          # (T, D)
        k_h = (lax.dot_general(x, wk_h, TRANS_B, preferred_element_type=jnp.float32)
               + vec[ROW_BK + h:ROW_BK + h + 1, 0:D])
        v_h = (lax.dot_general(x, wv_h, TRANS_B, preferred_element_type=jnp.float32)
               + vec[ROW_BV + h:ROW_BV + h + 1, 0:D])
        scores.append(lax.dot_general(q_h, k_h, TRANS_B,
                                      preferred_element_type=jnp.float32))  # (T, T)
        vals.append(v_h)

    # fused softmax: stack all heads along sublanes, one max/exp/sum/recip chain
    s_all = jnp.concatenate(scores, axis=0) + amask            # (H*T, T)
    m = jnp.max(s_all, axis=-1, keepdims=True)
    e = jnp.exp(s_all - m)
    p_all = e * pl.reciprocal(jnp.sum(e, axis=-1, keepdims=True), approx=True)

    # per-head context, accumulated against sublane row-slices of Wo
    # (no lane-axis concatenation of head contexts)
    attn = jnp.zeros((T, C), jnp.float32)
    for h in range(H):
        p_h = p_all[h * T:(h + 1) * T, :]                      # (T, T) sublane slice
        ctx_h = jnp.dot(p_h, vals[h], preferred_element_type=jnp.float32)   # (T, D)
        attn = attn + jnp.dot(ctx_h, wo[h * D:(h + 1) * D, :],
                              preferred_element_type=jnp.float32)           # (T, C)

    x = residual + attn + vec[ROW_BO:ROW_BO + 1, 0:C]          # dropout (p=0, eval) = id
    x = _layer_norm(x, vec[ROW_LN1_G:ROW_LN1_G + 1, 0:C],
                    vec[ROW_LN1_B:ROW_LN1_B + 1, 0:C])         # post-norm

    # ---------------- feed-forward ----------------
    residual = x
    h1 = (jnp.dot(x, w1_ref[...], preferred_element_type=jnp.float32)
          + vec[ROW_B1:ROW_B1 + 1, 0:F])
    h1 = jnp.maximum(h1, 0.0)                                  # relu
    h2 = (jnp.dot(h1, w2_ref[...], preferred_element_type=jnp.float32)
          + vec[ROW_B2:ROW_B2 + 1, 0:C])
    x = residual + h2
    x = _layer_norm(x, vec[ROW_LN2_G:ROW_LN2_G + 1, 0:C],
                    vec[ROW_LN2_B:ROW_LN2_B + 1, 0:C])         # post-norm

    out_ref[0] = x


def _pad_row(v):
    """(1, n) -> (1, 128): one parameter per 128-lane row, zero-padded."""
    return jnp.pad(v.astype(jnp.float32), ((0, 0), (0, LANES - v.shape[1])))


def transformer_encoder_layer(x_tbc, padding_mask, params):
    """x_tbc: (T, B, C) float32; padding_mask: (B, T) bool (True = pad)."""
    assert C <= LANES and F <= LANES
    (wq, bq, wk, bk, wv, bv, wo, bo,
     ln1_g, ln1_b, w1, b1, w2, b2, ln2_g, ln2_b) = params

    x = jnp.transpose(x_tbc, (1, 0, 2))                        # (B, T, C) batch-major
    pad = padding_mask.astype(jnp.int32).reshape(B, 1, T)      # tiny; additive built in-kernel

    # Q/K/V weights pre-transposed so per-head selection in the kernel is a
    # sublane row slice: rows [h*D:(h+1)*D] of each C-row block are W[:, head h].T.
    wqkv_t = jnp.concatenate([wq.T, wk.T, wv.T], axis=0)       # (3C, C)

    # packed bias / LayerNorm parameters: one per row, 128 lanes wide
    rows = ([_pad_row(bq[:, h * D:(h + 1) * D]) for h in range(H)]
            + [_pad_row(bk[:, h * D:(h + 1) * D]) for h in range(H)]
            + [_pad_row(bv[:, h * D:(h + 1) * D]) for h in range(H)]
            + [_pad_row(bo), _pad_row(ln1_g), _pad_row(ln1_b),
               _pad_row(b1), _pad_row(b2), _pad_row(ln2_g), _pad_row(ln2_b)])
    rows += [jnp.zeros((1, LANES), jnp.float32)] * (VROWS - len(rows))
    vec = jnp.concatenate(rows, axis=0)                        # (VROWS, 128)

    out = pl.pallas_call(
        encoder_layer_kernel,
        out_shape=jax.ShapeDtypeStruct((B, T, C), jnp.float32),
        grid=(B,),
        in_specs=[
            pl.BlockSpec((1, 1, T), lambda b: (b, 0, 0)),      # key-padding mask row
            pl.BlockSpec((1, T, C), lambda b: (b, 0, 0)),      # x (per batch element)
            pl.BlockSpec((3 * C, C), lambda b: (0, 0)),        # [Wq^T; Wk^T; Wv^T]
            pl.BlockSpec((C, C), lambda b: (0, 0)),            # Wo
            pl.BlockSpec((C, F), lambda b: (0, 0)),            # W1
            pl.BlockSpec((F, C), lambda b: (0, 0)),            # W2
            pl.BlockSpec((VROWS, LANES), lambda b: (0, 0)),    # packed biases / LN params
        ],
        out_specs=pl.BlockSpec((1, T, C), lambda b: (b, 0, 0)),
        compiler_params=pltpu.CompilerParams(
            dimension_semantics=("parallel",)),                # v7x: one batch elem per TC
    )(pad, x, wqkv_t, wo, w1, w2, vec)

    return out.transpose(1, 0, 2)                              # back to (T, B, C)


# ----------------------- pure-JAX reference (independent math) -----------------------
def _ln_ref(x, g, b):
    mu = jnp.mean(x, axis=-1, keepdims=True)
    var = jnp.mean((x - mu) * (x - mu), axis=-1, keepdims=True)
    return (x - mu) / jnp.sqrt(var + EPS) * g + b


def reference(x_tbc, padding_mask, params):
    (wq, bq, wk, bk, wv, bv, wo, bo,
     ln1_g, ln1_b, w1, b1, w2, b2, ln2_g, ln2_b) = params
    x = jnp.transpose(x_tbc, (1, 0, 2))                        # (B, T, C)
    add_mask = jnp.where(padding_mask, NEG, 0.0)[:, None, None, :]   # (B,1,1,T)

    residual = x
    q = (x @ wq + bq) * SCALE
    k = x @ wk + bk
    v = x @ wv + bv
    qh = q.reshape(B, T, H, D).transpose(0, 2, 1, 3)
    kh = k.reshape(B, T, H, D).transpose(0, 2, 1, 3)
    vh = v.reshape(B, T, H, D).transpose(0, 2, 1, 3)
    scores = jnp.einsum("bhqd,bhkd->bhqk", qh, kh) + add_mask
    p = jax.nn.softmax(scores, axis=-1)
    attn = jnp.einsum("bhqk,bhkd->bhqd", p, vh).transpose(0, 2, 1, 3).reshape(B, T, C)
    attn = attn @ wo + bo
    x = residual + attn
    x = _ln_ref(x, ln1_g, ln1_b)
    residual = x
    x = jnp.maximum(x @ w1 + b1, 0.0) @ w2 + b2
    x = residual + x
    x = _ln_ref(x, ln2_g, ln2_b)
    return x.transpose(1, 0, 2)


def make_params(key):
    keys = jax.random.split(key, 12)
    s = 0.05
    wq = jax.random.normal(keys[0], (C, C), jnp.float32) * s
    wk = jax.random.normal(keys[1], (C, C), jnp.float32) * s
    wv = jax.random.normal(keys[2], (C, C), jnp.float32) * s
    wo = jax.random.normal(keys[3], (C, C), jnp.float32) * s
    bq = jax.random.normal(keys[4], (1, C), jnp.float32) * s
    bk = jax.random.normal(keys[5], (1, C), jnp.float32) * s
    bv = jax.random.normal(keys[6], (1, C), jnp.float32) * s
    bo = jax.random.normal(keys[7], (1, C), jnp.float32) * s
    w1 = jax.random.normal(keys[8], (C, F), jnp.float32) * s
    b1 = jax.random.normal(keys[9], (1, F), jnp.float32) * s
    w2 = jax.random.normal(keys[10], (F, C), jnp.float32) * s
    b2 = jax.random.normal(keys[11], (1, C), jnp.float32) * s
    ln1_g = jnp.ones((1, C), jnp.float32)
    ln1_b = jnp.zeros((1, C), jnp.float32)
    ln2_g = jnp.ones((1, C), jnp.float32)
    ln2_b = jnp.zeros((1, C), jnp.float32)
    return (wq, bq, wk, bk, wv, bv, wo, bo,
            ln1_g, ln1_b, w1, b1, w2, b2, ln2_g, ln2_b)


if __name__ == "__main__":
    key = jax.random.PRNGKey(0)
    kx, kp = jax.random.split(key)
    params = make_params(kp)

    x = jax.random.normal(kx, (T, B, C), jnp.float32)          # (T, B, C)
    padding_mask = jnp.zeros((B, T), dtype=bool)
    padding_mask = padding_mask.at[1, T - 2:].set(True)        # pad tail of batch 1

    out = transformer_encoder_layer(x, padding_mask, params)
    out = jax.block_until_ready(out)

    ref = reference(x, padding_mask, params)
    assert out.shape == (T, B, C)
    # tolerance accounts for the approximate (EUP) reciprocal used in the softmax
    assert jnp.allclose(out, ref, rtol=5e-3, atol=5e-3), "mismatch vs. JAX reference"

    print("KERNEL_OK")
</pallas_src>

<mosaic_0001>
module attributes {stable_mosaic.version = 11 : i64} {
  func.func @encoder_layer_kernel(%arg0: i32, %arg1: memref<1x1x8xi32, #tpu.memory_space<vmem>>, %arg2: memref<1x8x32xf32, #tpu.memory_space<vmem>>, %arg3: memref<96x32xf32, #tpu.memory_space<vmem>>, %arg4: memref<32x32xf32, #tpu.memory_space<vmem>>, %arg5: memref<32x64xf32, #tpu.memory_space<vmem>>, %arg6: memref<64x32xf32, #tpu.memory_space<vmem>>, %arg7: memref<24x128xf32, #tpu.memory_space<vmem>>, %arg8: memref<1x8x32xf32, #tpu.memory_space<vmem>>) attributes {dimension_semantics = [#tpu.dimension_semantics<parallel>], iteration_bounds = array<i64: 2>, scalar_prefetch = 0 : i64, scratch_operands = 0 : i64, tpu.core_type = #tpu.core_type<tc>, window_params = [{transform_indices = @transform_0, window_bounds = array<i64: 1, 1, 8>}, {transform_indices = @transform_1, window_bounds = array<i64: 1, 8, 32>}, {pipeline_mode = #tpu.pipeline_mode<synchronous>, transform_indices = @transform_2, window_bounds = array<i64: 96, 32>}, {pipeline_mode = #tpu.pipeline_mode<synchronous>, transform_indices = @transform_3, window_bounds = array<i64: 32, 32>}, {pipeline_mode = #tpu.pipeline_mode<synchronous>, transform_indices = @transform_4, window_bounds = array<i64: 32, 64>}, {pipeline_mode = #tpu.pipeline_mode<synchronous>, transform_indices = @transform_5, window_bounds = array<i64: 64, 32>}, {pipeline_mode = #tpu.pipeline_mode<synchronous>, transform_indices = @transform_6, window_bounds = array<i64: 24, 128>}, {transform_indices = @transform_7, window_bounds = array<i64: 1, 8, 32>}]} {
    %c0 = arith.constant 0 : index
    %c0_0 = arith.constant 0 : index
    %c0_1 = arith.constant 0 : index
    %0 = vector.load %arg2[%c0, %c0_0, %c0_1] : memref<1x8x32xf32, #tpu.memory_space<vmem>>, vector<1x8x32xf32>
    %1 = vector.shape_cast %0 : vector<1x8x32xf32> to vector<8x32xf32>
    %c0_2 = arith.constant 0 : index
    %c0_3 = arith.constant 0 : index
    %c0_4 = arith.constant 0 : index
    %2 = vector.load %arg1[%c0_2, %c0_3, %c0_4] : memref<1x1x8xi32, #tpu.memory_space<vmem>>, vector<1x1x8xi32>
    %3 = vector.shape_cast %2 : vector<1x1x8xi32> to vector<1x8xi32>
    %c0_i32 = arith.constant 0 : i32
    %4 = vector.broadcast %c0_i32 : i32 to vector<1x8xi32>
    %5 = arith.cmpi ne, %3, %4 : vector<1x8xi32>
    %cst = arith.constant -1.000000e+09 : f32
    %cst_5 = arith.constant 0.000000e+00 : f32
    %6 = vector.broadcast %cst : f32 to vector<1x8xf32>
    %7 = vector.broadcast %cst_5 : f32 to vector<1x8xf32>
    %8 = arith.select %5, %6, %7 : vector<1x8xi1>, vector<1x8xf32>
    %c0_6 = arith.constant 0 : index
    %c0_7 = arith.constant 0 : index
    %9 = vector.load %arg7[%c0_6, %c0_7] : memref<24x128xf32, #tpu.memory_space<vmem>>, vector<24x128xf32>
    %c0_8 = arith.constant 0 : index
    %c0_9 = arith.constant 0 : index
    %10 = vector.load %arg3[%c0_8, %c0_9] : memref<96x32xf32, #tpu.memory_space<vmem>>, vector<96x32xf32>
    %c0_10 = arith.constant 0 : index
    %c0_11 = arith.constant 0 : index
    %11 = vector.load %arg4[%c0_10, %c0_11] : memref<32x32xf32, #tpu.memory_space<vmem>>, vector<32x32xf32>
    %12 = vector.extract_strided_slice %10 {offsets = [0, 0], sizes = [8, 32], strides = [1, 1]} : vector<96x32xf32> to vector<8x32xf32>
    %13 = vector.extract_strided_slice %10 {offsets = [32, 0], sizes = [8, 32], strides = [1, 1]} : vector<96x32xf32> to vector<8x32xf32>
    %14 = vector.extract_strided_slice %10 {offsets = [64, 0], sizes = [8, 32], strides = [1, 1]} : vector<96x32xf32> to vector<8x32xf32>
    %cst_12 = arith.constant dense<0.000000e+00> : vector<8x8xf32>
    %15 = tpu.matmul %1, %12, %cst_12 {dimension_numbers = #tpu.dot_dimension_numbers<[1], [1], [0], [0], [0, 0, 1, 0], [], []>} : vector<8x32xf32>, vector<8x32xf32>, vector<8x8xf32> -> vector<8x8xf32>
    %16 = vector.extract_strided_slice %9 {offsets = [0, 0], sizes = [1, 8], strides = [1, 1]} : vector<24x128xf32> to vector<1x8xf32>
    %17 = vector.broadcast %16 : vector<1x8xf32> to vector<8x8xf32>
    %18 = arith.addf %15, %17 : vector<8x8xf32>
    %cst_13 = arith.constant 0.353553385 : f32
    %19 = vector.broadcast %cst_13 : f32 to vector<8x8xf32>
    %20 = arith.mulf %18, %19 : vector<8x8xf32>
    %cst_14 = arith.constant dense<0.000000e+00> : vector<8x8xf32>
    %21 = tpu.matmul %1, %13, %cst_14 {dimension_numbers = #tpu.dot_dimension_numbers<[1], [1], [0], [0], [0, 0, 1, 0], [], []>} : vector<8x32xf32>, vector<8x32xf32>, vector<8x8xf32> -> vector<8x8xf32>
    %22 = vector.extract_strided_slice %9 {offsets = [4, 0], sizes = [1, 8], strides = [1, 1]} : vector<24x128xf32> to vector<1x8xf32>
    %23 = vector.broadcast %22 : vector<1x8xf32> to vector<8x8xf32>
    %24 = arith.addf %21, %23 : vector<8x8xf32>
    %cst_15 = arith.constant dense<0.000000e+00> : vector<8x8xf32>
    %25 = tpu.matmul %1, %14, %cst_15 {dimension_numbers = #tpu.dot_dimension_numbers<[1], [1], [0], [0], [0, 0, 1, 0], [], []>} : vector<8x32xf32>, vector<8x32xf32>, vector<8x8xf32> -> vector<8x8xf32>
    %26 = vector.extract_strided_slice %9 {offsets = [8, 0], sizes = [1, 8], strides = [1, 1]} : vector<24x128xf32> to vector<1x8xf32>
    %27 = vector.broadcast %26 : vector<1x8xf32> to vector<8x8xf32>
    %28 = arith.addf %25, %27 : vector<8x8xf32>
    %cst_16 = arith.constant dense<0.000000e+00> : vector<8x8xf32>
    %29 = tpu.matmul %20, %24, %cst_16 {dimension_numbers = #tpu.dot_dimension_numbers<[1], [1], [0], [0], [0, 0, 1, 0], [], []>} : vector<8x8xf32>, vector<8x8xf32>, vector<8x8xf32> -> vector<8x8xf32>
    %30 = vector.extract_strided_slice %10 {offsets = [8, 0], sizes = [8, 32], strides = [1, 1]} : vector<96x32xf32> to vector<8x32xf32>
    %31 = vector.extract_strided_slice %10 {offsets = [40, 0], sizes = [8, 32], strides = [1, 1]} : vector<96x32xf32> to vector<8x32xf32>
    %32 = vector.extract_strided_slice %10 {offsets = [72, 0], sizes = [8, 32], strides = [1, 1]} : vector<96x32xf32> to vector<8x32xf32>
    %cst_17 = arith.constant dense<0.000000e+00> : vector<8x8xf32>
    %33 = tpu.matmul %1, %30, %cst_17 {dimension_numbers = #tpu.dot_dimension_numbers<[1], [1], [0], [0], [0, 0, 1, 0], [], []>} : vector<8x32xf32>, vector<8x32xf32>, vector<8x8xf32> -> vector<8x8xf32>
    %34 = vector.extract_strided_slice %9 {offsets = [1, 0], sizes = [1, 8], strides = [1, 1]} : vector<24x128xf32> to vector<1x8xf32>
    %35 = vector.broadcast %34 : vector<1x8xf32> to vector<8x8xf32>
    %36 = arith.addf %33, %35 : vector<8x8xf32>
    %cst_18 = arith.constant 0.353553385 : f32
    %37 = vector.broadcast %cst_18 : f32 to vector<8x8xf32>
    %38 = arith.mulf %36, %37 : vector<8x8xf32>
    %cst_19 = arith.constant dense<0.000000e+00> : vector<8x8xf32>
    %39 = tpu.matmul %1, %31, %cst_19 {dimension_numbers = #tpu.dot_dimension_numbers<[1], [1], [0], [0], [0, 0, 1, 0], [], []>} : vector<8x32xf32>, vector<8x32xf32>, vector<8x8xf32> -> vector<8x8xf32>
    %40 = vector.extract_strided_slice %9 {offsets = [5, 0], sizes = [1, 8], strides = [1, 1]} : vector<24x128xf32> to vector<1x8xf32>
    %41 = vector.broadcast %40 : vector<1x8xf32> to vector<8x8xf32>
    %42 = arith.addf %39, %41 : vector<8x8xf32>
    %cst_20 = arith.constant dense<0.000000e+00> : vector<8x8xf32>
    %43 = tpu.matmul %1, %32, %cst_20 {dimension_numbers = #tpu.dot_dimension_numbers<[1], [1], [0], [0], [0, 0, 1, 0], [], []>} : vector<8x32xf32>, vector<8x32xf32>, vector<8x8xf32> -> vector<8x8xf32>
    %44 = vector.extract_strided_slice %9 {offsets = [9, 0], sizes = [1, 8], strides = [1, 1]} : vector<24x128xf32> to vector<1x8xf32>
    %45 = vector.broadcast %44 : vector<1x8xf32> to vector<8x8xf32>
    %46 = arith.addf %43, %45 : vector<8x8xf32>
    %cst_21 = arith.constant dense<0.000000e+00> : vector<8x8xf32>
    %47 = tpu.matmul %38, %42, %cst_21 {dimension_numbers = #tpu.dot_dimension_numbers<[1], [1], [0], [0], [0, 0, 1, 0], [], []>} : vector<8x8xf32>, vector<8x8xf32>, vector<8x8xf32> -> vector<8x8xf32>
    %48 = vector.extract_strided_slice %10 {offsets = [16, 0], sizes = [8, 32], strides = [1, 1]} : vector<96x32xf32> to vector<8x32xf32>
    %49 = vector.extract_strided_slice %10 {offsets = [48, 0], sizes = [8, 32], strides = [1, 1]} : vector<96x32xf32> to vector<8x32xf32>
    %50 = vector.extract_strided_slice %10 {offsets = [80, 0], sizes = [8, 32], strides = [1, 1]} : vector<96x32xf32> to vector<8x32xf32>
    %cst_22 = arith.constant dense<0.000000e+00> : vector<8x8xf32>
    %51 = tpu.matmul %1, %48, %cst_22 {dimension_numbers = #tpu.dot_dimension_numbers<[1], [1], [0], [0], [0, 0, 1, 0], [], []>} : vector<8x32xf32>, vector<8x32xf32>, vector<8x8xf32> -> vector<8x8xf32>
    %52 = vector.extract_strided_slice %9 {offsets = [2, 0], sizes = [1, 8], strides = [1, 1]} : vector<24x128xf32> to vector<1x8xf32>
    %53 = vector.broadcast %52 : vector<1x8xf32> to vector<8x8xf32>
    %54 = arith.addf %51, %53 : vector<8x8xf32>
    %cst_23 = arith.constant 0.353553385 : f32
    %55 = vector.broadcast %cst_23 : f32 to vector<8x8xf32>
    %56 = arith.mulf %54, %55 : vector<8x8xf32>
    %cst_24 = arith.constant dense<0.000000e+00> : vector<8x8xf32>
    %57 = tpu.matmul %1, %49, %cst_24 {dimension_numbers = #tpu.dot_dimension_numbers<[1], [1], [0], [0], [0, 0, 1, 0], [], []>} : vector<8x32xf32>, vector<8x32xf32>, vector<8x8xf32> -> vector<8x8xf32>
    %58 = vector.extract_strided_slice %9 {offsets = [6, 0], sizes = [1, 8], strides = [1, 1]} : vector<24x128xf32> to vector<1x8xf32>
    %59 = vector.broadcast %58 : vector<1x8xf32> to vector<8x8xf32>
    %60 = arith.addf %57, %59 : vector<8x8xf32>
    %cst_25 = arith.constant dense<0.000000e+00> : vector<8x8xf32>
    %61 = tpu.matmul %1, %50, %cst_25 {dimension_numbers = #tpu.dot_dimension_numbers<[1], [1], [0], [0], [0, 0, 1, 0], [], []>} : vector<8x32xf32>, vector<8x32xf32>, vector<8x8xf32> -> vector<8x8xf32>
    %62 = vector.extract_strided_slice %9 {offsets = [10, 0], sizes = [1, 8], strides = [1, 1]} : vector<24x128xf32> to vector<1x8xf32>
    %63 = vector.broadcast %62 : vector<1x8xf32> to vector<8x8xf32>
    %64 = arith.addf %61, %63 : vector<8x8xf32>
    %cst_26 = arith.constant dense<0.000000e+00> : vector<8x8xf32>
    %65 = tpu.matmul %56, %60, %cst_26 {dimension_numbers = #tpu.dot_dimension_numbers<[1], [1], [0], [0], [0, 0, 1, 0], [], []>} : vector<8x8xf32>, vector<8x8xf32>, vector<8x8xf32> -> vector<8x8xf32>
    %66 = vector.extract_strided_slice %10 {offsets = [24, 0], sizes = [8, 32], strides = [1, 1]} : vector<96x32xf32> to vector<8x32xf32>
    %67 = vector.extract_strided_slice %10 {offsets = [56, 0], sizes = [8, 32], strides = [1, 1]} : vector<96x32xf32> to vector<8x32xf32>
    %68 = vector.extract_strided_slice %10 {offsets = [88, 0], sizes = [8, 32], strides = [1, 1]} : vector<96x32xf32> to vector<8x32xf32>
    %cst_27 = arith.constant dense<0.000000e+00> : vector<8x8xf32>
    %69 = tpu.matmul %1, %66, %cst_27 {dimension_numbers = #tpu.dot_dimension_numbers<[1], [1], [0], [0], [0, 0, 1, 0], [], []>} : vector<8x32xf32>, vector<8x32xf32>, vector<8x8xf32> -> vector<8x8xf32>
    %70 = vector.extract_strided_slice %9 {offsets = [3, 0], sizes = [1, 8], strides = [1, 1]} : vector<24x128xf32> to vector<1x8xf32>
    %71 = vector.broadcast %70 : vector<1x8xf32> to vector<8x8xf32>
    %72 = arith.addf %69, %71 : vector<8x8xf32>
    %cst_28 = arith.constant 0.353553385 : f32
    %73 = vector.broadcast %cst_28 : f32 to vector<8x8xf32>
    %74 = arith.mulf %72, %73 : vector<8x8xf32>
    %cst_29 = arith.constant dense<0.000000e+00> : vector<8x8xf32>
    %75 = tpu.matmul %1, %67, %cst_29 {dimension_numbers = #tpu.dot_dimension_numbers<[1], [1], [0], [0], [0, 0, 1, 0], [], []>} : vector<8x32xf32>, vector<8x32xf32>, vector<8x8xf32> -> vector<8x8xf32>
    %76 = vector.extract_strided_slice %9 {offsets = [7, 0], sizes = [1, 8], strides = [1, 1]} : vector<24x128xf32> to vector<1x8xf32>
    %77 = vector.broadcast %76 : vector<1x8xf32> to vector<8x8xf32>
    %78 = arith.addf %75, %77 : vector<8x8xf32>
    %cst_30 = arith.constant dense<0.000000e+00> : vector<8x8xf32>
    %79 = tpu.matmul %1, %68, %cst_30 {dimension_numbers = #tpu.dot_dimension_numbers<[1], [1], [0], [0], [0, 0, 1, 0], [], []>} : vector<8x32xf32>, vector<8x32xf32>, vector<8x8xf32> -> vector<8x8xf32>
    %80 = vector.extract_strided_slice %9 {offsets = [11, 0], sizes = [1, 8], strides = [1, 1]} : vector<24x128xf32> to vector<1x8xf32>
    %81 = vector.broadcast %80 : vector<1x8xf32> to vector<8x8xf32>
    %82 = arith.addf %79, %81 : vector<8x8xf32>
    %cst_31 = arith.constant dense<0.000000e+00> : vector<8x8xf32>
    %83 = tpu.matmul %74, %78, %cst_31 {dimension_numbers = #tpu.dot_dimension_numbers<[1], [1], [0], [0], [0, 0, 1, 0], [], []>} : vector<8x8xf32>, vector<8x8xf32>, vector<8x8xf32> -> vector<8x8xf32>
    %84 = tpu.concatenate %29, %47, %65, %83 in 0 : vector<8x8xf32>, vector<8x8xf32>, vector<8x8xf32>, vector<8x8xf32> -> vector<32x8xf32>
    %85 = vector.broadcast %8 : vector<1x8xf32> to vector<32x8xf32>
    %86 = arith.addf %84, %85 : vector<32x8xf32>
    %cst_32 = arith.constant dense<0xFF800000> : vector<32xf32>
    %87 = vector.multi_reduction <maximumf>, %86, %cst_32 [1] : vector<32x8xf32> to vector<32xf32>
    %88 = vector.shape_cast %87 : vector<32xf32> to vector<32x1xf32>
    %89 = vector.broadcast %88 : vector<32x1xf32> to vector<32x8xf32>
    %90 = arith.subf %86, %89 : vector<32x8xf32>
    %91 = math.exp %90 : vector<32x8xf32>
    %cst_33 = arith.constant dense<0.000000e+00> : vector<32xf32>
    %92 = vector.multi_reduction <add>, %91, %cst_33 [1] : vector<32x8xf32> to vector<32xf32>
    %93 = vector.shape_cast %92 : vector<32xf32> to vector<32x1xf32>
    %94 = tpu.reciprocal %93 {approx = true} : vector<32x1xf32> -> vector<32x1xf32>
    %95 = vector.broadcast %94 : vector<32x1xf32> to vector<32x8xf32>
    %96 = arith.mulf %91, %95 : vector<32x8xf32>
    %cst_34 = arith.constant 0.000000e+00 : f32
    %97 = vector.broadcast %cst_34 : f32 to vector<8x32xf32>
    %98 = vector.extract_strided_slice %96 {offsets = [0, 0], sizes = [8, 8], strides = [1, 1]} : vector<32x8xf32> to vector<8x8xf32>
    %cst_35 = arith.constant dense<0.000000e+00> : vector<8x8xf32>
    %99 = tpu.matmul %98, %28, %cst_35 {dimension_numbers = #tpu.dot_dimension_numbers<[1], [0], [0], [1], [0, 0, 1, 1], [], []>} : vector<8x8xf32>, vector<8x8xf32>, vector<8x8xf32> -> vector<8x8xf32>
    %100 = vector.extract_strided_slice %11 {offsets = [0, 0], sizes = [8, 32], strides = [1, 1]} : vector<32x32xf32> to vector<8x32xf32>
    %cst_36 = arith.constant dense<0.000000e+00> : vector<8x32xf32>
    %101 = tpu.matmul %99, %100, %cst_36 {dimension_numbers = #tpu.dot_dimension_numbers<[1], [0], [0], [1], [0, 0, 1, 1], [], []>} : vector<8x8xf32>, vector<8x32xf32>, vector<8x32xf32> -> vector<8x32xf32>
    %102 = arith.addf %97, %101 : vector<8x32xf32>
    %103 = vector.extract_strided_slice %96 {offsets = [8, 0], sizes = [8, 8], strides = [1, 1]} : vector<32x8xf32> to vector<8x8xf32>
    %cst_37 = arith.constant dense<0.000000e+00> : vector<8x8xf32>
    %104 = tpu.matmul %103, %46, %cst_37 {dimension_numbers = #tpu.dot_dimension_numbers<[1], [0], [0], [1], [0, 0, 1, 1], [], []>} : vector<8x8xf32>, vector<8x8xf32>, vector<8x8xf32> -> vector<8x8xf32>
    %105 = vector.extract_strided_slice %11 {offsets = [8, 0], sizes = [8, 32], strides = [1, 1]} : vector<32x32xf32> to vector<8x32xf32>
    %cst_38 = arith.constant dense<0.000000e+00> : vector<8x32xf32>
    %106 = tpu.matmul %104, %105, %cst_38 {dimension_numbers = #tpu.dot_dimension_numbers<[1], [0], [0], [1], [0, 0, 1, 1], [], []>} : vector<8x8xf32>, vector<8x32xf32>, vector<8x32xf32> -> vector<8x32xf32>
    %107 = arith.addf %102, %106 : vector<8x32xf32>
    %108 = vector.extract_strided_slice %96 {offsets = [16, 0], sizes = [8, 8], strides = [1, 1]} : vector<32x8xf32> to vector<8x8xf32>
    %cst_39 = arith.constant dense<0.000000e+00> : vector<8x8xf32>
    %109 = tpu.matmul %108, %64, %cst_39 {dimension_numbers = #tpu.dot_dimension_numbers<[1], [0], [0], [1], [0, 0, 1, 1], [], []>} : vector<8x8xf32>, vector<8x8xf32>, vector<8x8xf32> -> vector<8x8xf32>
    %110 = vector.extract_strided_slice %11 {offsets = [16, 0], sizes = [8, 32], strides = [1, 1]} : vector<32x32xf32> to vector<8x32xf32>
    %cst_40 = arith.constant dense<0.000000e+00> : vector<8x32xf32>
    %111 = tpu.matmul %109, %110, %cst_40 {dimension_numbers = #tpu.dot_dimension_numbers<[1], [0], [0], [1], [0, 0, 1, 1], [], []>} : vector<8x8xf32>, vector<8x32xf32>, vector<8x32xf32> -> vector<8x32xf32>
    %112 = arith.addf %107, %111 : vector<8x32xf32>
    %113 = vector.extract_strided_slice %96 {offsets = [24, 0], sizes = [8, 8], strides = [1, 1]} : vector<32x8xf32> to vector<8x8xf32>
    %cst_41 = arith.constant dense<0.000000e+00> : vector<8x8xf32>
    %114 = tpu.matmul %113, %82, %cst_41 {dimension_numbers = #tpu.dot_dimension_numbers<[1], [0], [0], [1], [0, 0, 1, 1], [], []>} : vector<8x8xf32>, vector<8x8xf32>, vector<8x8xf32> -> vector<8x8xf32>
    %115 = vector.extract_strided_slice %11 {offsets = [24, 0], sizes = [8, 32], strides = [1, 1]} : vector<32x32xf32> to vector<8x32xf32>
    %cst_42 = arith.constant dense<0.000000e+00> : vector<8x32xf32>
    %116 = tpu.matmul %114, %115, %cst_42 {dimension_numbers = #tpu.dot_dimension_numbers<[1], [0], [0], [1], [0, 0, 1, 1], [], []>} : vector<8x8xf32>, vector<8x32xf32>, vector<8x32xf32> -> vector<8x32xf32>
    %117 = arith.addf %112, %116 : vector<8x32xf32>
    %118 = arith.addf %1, %117 : vector<8x32xf32>
    %119 = vector.extract_strided_slice %9 {offsets = [12, 0], sizes = [1, 32], strides = [1, 1]} : vector<24x128xf32> to vector<1x32xf32>
    %120 = vector.broadcast %119 : vector<1x32xf32> to vector<8x32xf32>
    %121 = arith.addf %118, %120 : vector<8x32xf32>
    %122 = vector.extract_strided_slice %9 {offsets = [13, 0], sizes = [1, 32], strides = [1, 1]} : vector<24x128xf32> to vector<1x32xf32>
    %123 = vector.extract_strided_slice %9 {offsets = [14, 0], sizes = [1, 32], strides = [1, 1]} : vector<24x128xf32> to vector<1x32xf32>
    %124 = arith.mulf %121, %121 : vector<8x32xf32>
    %125 = tpu.concatenate %121, %124 in 0 : vector<8x32xf32>, vector<8x32xf32> -> vector<16x32xf32>
    %cst_43 = arith.constant dense<0.000000e+00> : vector<16xf32>
    %126 = vector.multi_reduction <add>, %125, %cst_43 [1] : vector<16x32xf32> to vector<16xf32>
    %127 = vector.shape_cast %126 : vector<16xf32> to vector<16x1xf32>
    %cst_44 = arith.constant 3.200000e+01 : f32
    %128 = vector.broadcast %cst_44 : f32 to vector<16x1xf32>
    %129 = arith.divf %127, %128 : vector<16x1xf32>
    %130 = vector.extract_strided_slice %129 {offsets = [0, 0], sizes = [8, 1], strides = [1, 1]} : vector<16x1xf32> to vector<8x1xf32>
    %131 = vector.extract_strided_slice %129 {offsets = [8, 0], sizes = [8, 1], strides = [1, 1]} : vector<16x1xf32> to vector<8x1xf32>
    %132 = arith.mulf %130, %130 : vector<8x1xf32>
    %133 = arith.subf %131, %132 : vector<8x1xf32>
    %cst_45 = arith.constant 0.000000e+00 : f32
    %134 = vector.broadcast %cst_45 : f32 to vector<8x1xf32>
    %135 = arith.maximumf %133, %134 : vector<8x1xf32>
    %136 = vector.broadcast %130 : vector<8x1xf32> to vector<8x32xf32>
    %137 = arith.subf %121, %136 : vector<8x32xf32>
    %cst_46 = arith.constant 9.99999974E-6 : f32
    %138 = vector.broadcast %cst_46 : f32 to vector<8x1xf32>
    %139 = arith.addf %135, %138 : vector<8x1xf32>
    %140 = math.rsqrt %139 : vector<8x1xf32>
    %141 = vector.broadcast %140 : vector<8x1xf32> to vector<8x32xf32>
    %142 = arith.mulf %137, %141 : vector<8x32xf32>
    %143 = vector.broadcast %122 : vector<1x32xf32> to vector<8x32xf32>
    %144 = arith.mulf %142, %143 : vector<8x32xf32>
    %145 = vector.broadcast %123 : vector<1x32xf32> to vector<8x32xf32>
    %146 = arith.addf %144, %145 : vector<8x32xf32>
    %c0_47 = arith.constant 0 : index
    %c0_48 = arith.constant 0 : index
    %147 = vector.load %arg5[%c0_47, %c0_48] : memref<32x64xf32, #tpu.memory_space<vmem>>, vector<32x64xf32>
    %cst_49 = arith.constant dense<0.000000e+00> : vector<8x64xf32>
    %148 = tpu.matmul %146, %147, %cst_49 {dimension_numbers = #tpu.dot_dimension_numbers<[1], [0], [0], [1], [0, 0, 1, 1], [], []>} : vector<8x32xf32>, vector<32x64xf32>, vector<8x64xf32> -> vector<8x64xf32>
    %149 = vector.extract_strided_slice %9 {offsets = [15, 0], sizes = [1, 64], strides = [1, 1]} : vector<24x128xf32> to vector<1x64xf32>
    %150 = vector.broadcast %149 : vector<1x64xf32> to vector<8x64xf32>
    %151 = arith.addf %148, %150 : vector<8x64xf32>
    %cst_50 = arith.constant 0.000000e+00 : f32
    %152 = vector.broadcast %cst_50 : f32 to vector<8x64xf32>
    %153 = arith.maximumf %151, %152 : vector<8x64xf32>
    %c0_51 = arith.constant 0 : index
    %c0_52 = arith.constant 0 : index
    %154 = vector.load %arg6[%c0_51, %c0_52] : memref<64x32xf32, #tpu.memory_space<vmem>>, vector<64x32xf32>
    %cst_53 = arith.constant dense<0.000000e+00> : vector<8x32xf32>
    %155 = tpu.matmul %153, %154, %cst_53 {dimension_numbers = #tpu.dot_dimension_numbers<[1], [0], [0], [1], [0, 0, 1, 1], [], []>} : vector<8x64xf32>, vector<64x32xf32>, vector<8x32xf32> -> vector<8x32xf32>
    %156 = vector.extract_strided_slice %9 {offsets = [16, 0], sizes = [1, 32], strides = [1, 1]} : vector<24x128xf32> to vector<1x32xf32>
    %157 = vector.broadcast %156 : vector<1x32xf32> to vector<8x32xf32>
    %158 = arith.addf %155, %157 : vector<8x32xf32>
    %159 = arith.addf %146, %158 : vector<8x32xf32>
    %160 = vector.extract_strided_slice %9 {offsets = [17, 0], sizes = [1, 32], strides = [1, 1]} : vector<24x128xf32> to vector<1x32xf32>
    %161 = vector.extract_strided_slice %9 {offsets = [18, 0], sizes = [1, 32], strides = [1, 1]} : vector<24x128xf32> to vector<1x32xf32>
    %162 = arith.mulf %159, %159 : vector<8x32xf32>
    %163 = tpu.concatenate %159, %162 in 0 : vector<8x32xf32>, vector<8x32xf32> -> vector<16x32xf32>
    %cst_54 = arith.constant dense<0.000000e+00> : vector<16xf32>
    %164 = vector.multi_reduction <add>, %163, %cst_54 [1] : vector<16x32xf32> to vector<16xf32>
    %165 = vector.shape_cast %164 : vector<16xf32> to vector<16x1xf32>
    %cst_55 = arith.constant 3.200000e+01 : f32
    %166 = vector.broadcast %cst_55 : f32 to vector<16x1xf32>
    %167 = arith.divf %165, %166 : vector<16x1xf32>
    %168 = vector.extract_strided_slice %167 {offsets = [0, 0], sizes = [8, 1], strides = [1, 1]} : vector<16x1xf32> to vector<8x1xf32>
    %169 = vector.extract_strided_slice %167 {offsets = [8, 0], sizes = [8, 1], strides = [1, 1]} : vector<16x1xf32> to vector<8x1xf32>
    %170 = arith.mulf %168, %168 : vector<8x1xf32>
    %171 = arith.subf %169, %170 : vector<8x1xf32>
    %cst_56 = arith.constant 0.000000e+00 : f32
    %172 = vector.broadcast %cst_56 : f32 to vector<8x1xf32>
    %173 = arith.maximumf %171, %172 : vector<8x1xf32>
    %174 = vector.broadcast %168 : vector<8x1xf32> to vector<8x32xf32>
    %175 = arith.subf %159, %174 : vector<8x32xf32>
    %cst_57 = arith.constant 9.99999974E-6 : f32
    %176 = vector.broadcast %cst_57 : f32 to vector<8x1xf32>
    %177 = arith.addf %173, %176 : vector<8x1xf32>
    %178 = math.rsqrt %177 : vector<8x1xf32>
    %179 = vector.broadcast %178 : vector<8x1xf32> to vector<8x32xf32>
    %180 = arith.mulf %175, %179 : vector<8x32xf32>
    %181 = vector.broadcast %160 : vector<1x32xf32> to vector<8x32xf32>
    %182 = arith.mulf %180, %181 : vector<8x32xf32>
    %183 = vector.broadcast %161 : vector<1x32xf32> to vector<8x32xf32>
    %184 = arith.addf %182, %183 : vector<8x32xf32>
    %c0_58 = arith.constant 0 : index
    %c0_59 = arith.constant 0 : index
    %c0_60 = arith.constant 0 : index
    %185 = vector.load %arg8[%c0_58, %c0_59, %c0_60] : memref<1x8x32xf32, #tpu.memory_space<vmem>>, vector<1x8x32xf32>
    %186 = vector.shape_cast %185 : vector<1x8x32xf32> to vector<8x32xf32>
    %187 = vector.shape_cast %184 : vector<8x32xf32> to vector<1x8x32xf32>
    tpu.vector_store %arg8[%c0_58, %c0_59, %c0_60], %187 {strides = array<i32>} : memref<1x8x32xf32, #tpu.memory_space<vmem>>, vector<1x8x32xf32>,
    return
  }
  func.func @transform_0(%arg0: i32) -> (i32, i32, i32) {
    %c0_i32 = arith.constant 0 : i32
    %c0_i32_0 = arith.constant 0 : i32
    %c0_i32_1 = arith.constant 0 : i32
    return %arg0, %c0_i32, %c0_i32_0 : i32, i32, i32
  }
  func.func @transform_1(%arg0: i32) -> (i32, i32, i32) {
    %c0_i32 = arith.constant 0 : i32
    %c0_i32_0 = arith.constant 0 : i32
    %c0_i32_1 = arith.constant 0 : i32
    return %arg0, %c0_i32, %c0_i32_0 : i32, i32, i32
  }
  func.func @transform_2(%arg0: i32) -> (i32, i32) {
    %c0_i32 = arith.constant 0 : i32
    %c0_i32_0 = arith.constant 0 : i32
    %c0_i32_1 = arith.constant 0 : i32
    return %c0_i32, %c0_i32_0 : i32, i32
  }
  func.func @transform_3(%arg0: i32) -> (i32, i32) {
    %c0_i32 = arith.constant 0 : i32
    %c0_i32_0 = arith.constant 0 : i32
    %c0_i32_1 = arith.constant 0 : i32
    return %c0_i32, %c0_i32_0 : i32, i32
  }
  func.func @transform_4(%arg0: i32) -> (i32, i32) {
    %c0_i32 = arith.constant 0 : i32
    %c0_i32_0 = arith.constant 0 : i32
    %c0_i32_1 = arith.constant 0 : i32
    return %c0_i32, %c0_i32_0 : i32, i32
  }
  func.func @transform_5(%arg0: i32) -> (i32, i32) {
    %c0_i32 = arith.constant 0 : i32
    %c0_i32_0 = arith.constant 0 : i32
    %c0_i32_1 = arith.constant 0 : i32
    return %c0_i32, %c0_i32_0 : i32, i32
  }
  func.func @transform_6(%arg0: i32) -> (i32, i32) {
    %c0_i32 = arith.constant 0 : i32
    %c0_i32_0 = arith.constant 0 : i32
    %c0_i32_1 = arith.constant 0 : i32
    return %c0_i32, %c0_i32_0 : i32, i32
  }
  func.func @transform_7(%arg0: i32) -> (i32, i32, i32) {
    %c0_i32 = arith.constant 0 : i32
    %c0_i32_0 = arith.constant 0 : i32
    %c0_i32_1 = arith.constant 0 : i32
    return %arg0, %c0_i32, %c0_i32_0 : i32, i32, i32
  }
}

</mosaic_0001>

<llo_original>
// kernel: tpu_custom_call.1
$region0: #{tpu_custom_call.1}
  #allocation0 [shape = 'u32[]', space=smem, size = 0x4, offset = 0x4, fixed_abs, tag = 'smem constant byte address 0x4 - core index']
  #allocation1 [shape = 'u32[144,128]{1,0:T(1,128)}', space=vmem, size = 0x12000, scoped, tag = 'internal scratch']
  %s0 = inlined_call_operand.vmem [shape: s32[2,1,8], index: 0, kind: input, shape index: {}]
  %s1 = inlined_call_operand.vmem [shape: f32[2,8,32], index: 1, kind: input, shape index: {}]
  %s2 = inlined_call_operand.vmem [shape: f32[96,32], index: 2, kind: input, shape index: {}]
  %s3 = inlined_call_operand.vmem [shape: f32[32,32], index: 3, kind: input, shape index: {}]
  %s4 = inlined_call_operand.vmem [shape: f32[32,64], index: 4, kind: input, shape index: {}]
  %s5 = inlined_call_operand.vmem [shape: f32[64,32], index: 5, kind: input, shape index: {}]
  %s6 = inlined_call_operand.vmem [shape: f32[24,128], index: 6, kind: input, shape index: {}]
  %s7 = inlined_call_operand.hbm [shape: f32[2,8,32], index: 7, kind: output, shape index: {}]
  %s8 = sld [smem:[#allocation0]]
  $region61: #{tpu_custom_call.1} parent=0
    _
  %s10 = ssub.s32 1, %s8
  %s11 = scalar_select 0, %s10, %s8
  $region1: #{tpu_custom_call.1} parent=0
    #allocation2 [shape = 'u8[8192]{0}', space=vmem, size = 0x2000, scoped, tag = 'output window, operand 0']
    #allocation3 [shape = 's32[2]{0}', space=sflag, size = 0x8, scoped, tag = 'scoped memory for tpu_custom_call.1']
    %12 = vsyncpa [#allocation3], 0
    %s13 = scalar_lea.sflag [#allocation3], 1
    %14 = vsyncpa %s13, 0
    loop: start=0, step=1, limit=4
    $region2: #{tpu_custom_call.1} parent=1 // loop_pre_header
      _
    $region3: #{tpu_custom_call.1} parent=1 // loop_header
      %s16 = sphi 0, %s20
      %p17 = scmp.ge.s32.totalorder %s16, 4
      %s26 = sphi 0, %s28
      %s29 = sphi 0, %s26
      %s30 = sphi 0, %s29
      %s46 = sphi 0, %s30
      %s52 = sphi 0, %s54
      %s55 = sphi 0, %s52
      %s56 = sphi 0, %s55
      %s72 = sphi 0, %s56
      %s76 = sphi 0, %s76
      %s78 = sphi 0, %s76
      %s79 = sphi 0, %s78
      %s93 = sphi 0, %s79
      %s97 = sphi 0, %s97
      %s99 = sphi 0, %s97
      %s100 = sphi 0, %s99
      %s114 = sphi 0, %s100
      %s118 = sphi 0, %s118
      %s120 = sphi 0, %s118
      %s121 = sphi 0, %s120
      %s135 = sphi 0, %s121
      %s139 = sphi 0, %s139
      %s141 = sphi 0, %s139
      %s142 = sphi 0, %s141
      %s156 = sphi 0, %s142
      %s160 = sphi 0, %s160
      %s162 = sphi 0, %s160
      %s163 = sphi 0, %s162
      %s177 = sphi 0, %s163
      %s183 = sphi 0, %s185
      %s186 = sphi 0, %s183
      %s187 = sphi 0, %s186
      %s203 = sphi 0, %s187
    $region4: #{tpu_custom_call.1} parent=1 // loop_header_branch
      %19 = sbr.rel (%p17) target = $region8
    $region5: #{tpu_custom_call.1} parent=1 // loop_body
      %s21 = ssub.s32 %s16, 1
      %s22 = ssub.s32 %s16, 2
      %s23 = sadd.s32 %s16, 1
      %s24 = ssub.s32 %s16, %s23
      %p25 = scmp.eq.s32.totalorder %s24, 0
      %s27 = sadd.s32 %s26, 1
      %s28 = scalar_select %p25, %s26, %s27
      %p31 = pneg %p25
      %p32 = scmp.eq.s32.totalorder %s16, 1
      %p33 = por %p31, %p32
      %p34 = scmp.ne.s32.totalorder %s26, %s29
      %p35 = scmp.eq.s32.totalorder %s16, 0
      %p36 = por %p34, %p35
      %p37 = scmp.ne.s32.totalorder %s26, %s29
      %p38 = scmp.eq.s32.totalorder %s21, 1
      %p39 = por %p37, %p38
      %p40 = scmp.ne.s32.totalorder %s29, %s30
      %p41 = scmp.eq.s32.totalorder %s21, 0
      %p42 = por %p40, %p41
      %p43 = scmp.ne.s32.totalorder %s29, %s30
      %p44 = scmp.eq.s32.totalorder %s22, 1
      %p45 = por %p43, %p44
      %p47 = scmp.ne.s32.totalorder %s30, %s46
      %p48 = scmp.eq.s32.totalorder %s22, 0
      %p49 = por %p47, %p48
      %s50 = ssub.s32 %s16, %s23
      %p51 = scmp.eq.s32.totalorder %s50, 0
      %s53 = sadd.s32 %s52, 1
      %s54 = scalar_select %p51, %s52, %s53
      %p57 = pneg %p51
      %p58 = scmp.eq.s32.totalorder %s16, 1
      %p59 = por %p57, %p58
      %p60 = scmp.ne.s32.totalorder %s52, %s55
      %p61 = scmp.eq.s32.totalorder %s16, 0
      %p62 = por %p60, %p61
      %p63 = scmp.ne.s32.totalorder %s52, %s55
      %p64 = scmp.eq.s32.totalorder %s21, 1
      %p65 = por %p63, %p64
      %p66 = scmp.ne.s32.totalorder %s55, %s56
      %p67 = scmp.eq.s32.totalorder %s21, 0
      %p68 = por %p66, %p67
      %p69 = scmp.ne.s32.totalorder %s55, %s56
      %p70 = scmp.eq.s32.totalorder %s22, 1
      %p71 = por %p69, %p70
      %p73 = scmp.ne.s32.totalorder %s56, %s72
      %p74 = scmp.eq.s32.totalorder %s22, 0
      %p75 = por %p73, %p74
      %s77 = sadd.s32 %s76, 1
      %p80 = scmp.eq.s32.totalorder %s16, 1
      %p81 = scmp.ne.s32.totalorder %s76, %s78
      %p82 = scmp.eq.s32.totalorder %s16, 0
      %p83 = por %p81, %p82
      %p84 = scmp.ne.s32.totalorder %s76, %s78
      %p85 = scmp.eq.s32.totalorder %s21, 1
      %p86 = por %p84, %p85
      %p87 = scmp.ne.s32.totalorder %s78, %s79
      %p88 = scmp.eq.s32.totalorder %s21, 0
      %p89 = por %p87, %p88
      %p90 = scmp.ne.s32.totalorder %s78, %s79
      %p91 = scmp.eq.s32.totalorder %s22, 1
      %p92 = por %p90, %p91
      %p94 = scmp.ne.s32.totalorder %s79, %s93
      %p95 = scmp.eq.s32.totalorder %s22, 0
      %p96 = por %p94, %p95
      %s98 = sadd.s32 %s97, 1
      %p101 = scmp.eq.s32.totalorder %s16, 1
      %p102 = scmp.ne.s32.totalorder %s97, %s99
      %p103 = scmp.eq.s32.totalorder %s16, 0
      %p104 = por %p102, %p103
      %p105 = scmp.ne.s32.totalorder %s97, %s99
      %p106 = scmp.eq.s32.totalorder %s21, 1
      %p107 = por %p105, %p106
      %p108 = scmp.ne.s32.totalorder %s99, %s100
      %p109 = scmp.eq.s32.totalorder %s21, 0
      %p110 = por %p108, %p109
      %p111 = scmp.ne.s32.totalorder %s99, %s100
      %p112 = scmp.eq.s32.totalorder %s22, 1
      %p113 = por %p111, %p112
      %p115 = scmp.ne.s32.totalorder %s100, %s114
      %p116 = scmp.eq.s32.totalorder %s22, 0
      %p117 = por %p115, %p116
      %s119 = sadd.s32 %s118, 1
      %p122 = scmp.eq.s32.totalorder %s16, 1
      %p123 = scmp.ne.s32.totalorder %s118, %s120
      %p124 = scmp.eq.s32.totalorder %s16, 0
      %p125 = por %p123, %p124
      %p126 = scmp.ne.s32.totalorder %s118, %s120
      %p127 = scmp.eq.s32.totalorder %s21, 1
      %p128 = por %p126, %p127
      %p129 = scmp.ne.s32.totalorder %s120, %s121
      %p130 = scmp.eq.s32.totalorder %s21, 0
      %p131 = por %p129, %p130
      %p132 = scmp.ne.s32.totalorder %s120, %s121
      %p133 = scmp.eq.s32.totalorder %s22, 1
      %p134 = por %p132, %p133
      %p136 = scmp.ne.s32.totalorder %s121, %s135
      %p137 = scmp.eq.s32.totalorder %s22, 0
      %p138 = por %p136, %p137
      %s140 = sadd.s32 %s139, 1
      %p143 = scmp.eq.s32.totalorder %s16, 1
      %p144 = scmp.ne.s32.totalorder %s139, %s141
      %p145 = scmp.eq.s32.totalorder %s16, 0
      %p146 = por %p144, %p145
      %p147 = scmp.ne.s32.totalorder %s139, %s141
      %p148 = scmp.eq.s32.totalorder %s21, 1
      %p149 = por %p147, %p148
      %p150 = scmp.ne.s32.totalorder %s141, %s142
      %p151 = scmp.eq.s32.totalorder %s21, 0
      %p152 = por %p150, %p151
      %p153 = scmp.ne.s32.totalorder %s141, %s142
      %p154 = scmp.eq.s32.totalorder %s22, 1
      %p155 = por %p153, %p154
      %p157 = scmp.ne.s32.totalorder %s142, %s156
      %p158 = scmp.eq.s32.totalorder %s22, 0
      %p159 = por %p157, %p158
      %s161 = sadd.s32 %s160, 1
      %p164 = scmp.eq.s32.totalorder %s16, 1
      %p165 = scmp.ne.s32.totalorder %s160, %s162
      %p166 = scmp.eq.s32.totalorder %s16, 0
      %p167 = por %p165, %p166
      %p168 = scmp.ne.s32.totalorder %s160, %s162
      %p169 = scmp.eq.s32.totalorder %s21, 1
      %p170 = por %p168, %p169
      %p171 = scmp.ne.s32.totalorder %s162, %s163
      %p172 = scmp.eq.s32.totalorder %s21, 0
      %p173 = por %p171, %p172
      %p174 = scmp.ne.s32.totalorder %s162, %s163
      %p175 = scmp.eq.s32.totalorder %s22, 1
      %p176 = por %p174, %p175
      %p178 = scmp.ne.s32.totalorder %s163, %s177
      %p179 = scmp.eq.s32.totalorder %s22, 0
      %p180 = por %p178, %p179
      %s181 = ssub.s32 %s16, %s23
      %p182 = scmp.eq.s32.totalorder %s181, 0
      %s184 = sadd.s32 %s183, 1
      %s185 = scalar_select %p182, %s183, %s184
      %p188 = pneg %p182
      %p189 = scmp.eq.s32.totalorder %s16, 1
      %p190 = por %p188, %p189
      %p191 = scmp.ne.s32.totalorder %s183, %s186
      %p192 = scmp.eq.s32.totalorder %s16, 0
      %p193 = por %p191, %p192
      %p194 = scmp.ne.s32.totalorder %s183, %s186
      %p195 = scmp.eq.s32.totalorder %s21, 1
      %p196 = por %p194, %p195
      %p197 = scmp.ne.s32.totalorder %s186, %s187
      %p198 = scmp.eq.s32.totalorder %s21, 0
      %p199 = por %p197, %p198
      %p200 = scmp.ne.s32.totalorder %s186, %s187
      %p201 = scmp.eq.s32.totalorder %s22, 1
      %p202 = por %p200, %p201
      %p204 = scmp.ne.s32.totalorder %s187, %s203
      %p205 = scmp.eq.s32.totalorder %s22, 0
      %p206 = por %p204, %p205
      %p207 = scmp.le.s32.totalorder 1, %s16
      %p208 = scmp.lt.s32.totalorder %s16, 3
      %p209 = pnand %p207, %p208
      %p210 = pneg %p209
      // Predicated region
      $region9: #{tpu_custom_call.1} parent=5 // pred_check
        _
      $region10: #{tpu_custom_call.1} parent=5 // pred_check_branch
        %212 = sbr.rel (%p209) target = $region12
      $region11: #{tpu_custom_call.1} parent=5 // pred_region
        %s213 = ssub.s32 %s16, 1
        // Predicated region
        $region13: #{tpu_custom_call.1} parent=11 // pred_check
          %p214 = pneg %p89
        $region14: #{tpu_custom_call.1} parent=11 // pred_check_branch
          %216 = sbr.rel (%p214) target = $region16
        $region15: #{tpu_custom_call.1} parent=11 // pred_region
          _
        $region16: #{tpu_custom_call.1} parent=11 // pred_fallthru
          _
        // Predicated region
        $region17: #{tpu_custom_call.1} parent=11 // pred_check
          %p217 = pneg %p110
        $region18: #{tpu_custom_call.1} parent=11 // pred_check_branch
          %219 = sbr.rel (%p217) target = $region20
        $region19: #{tpu_custom_call.1} parent=11 // pred_region
          _
        $region20: #{tpu_custom_call.1} parent=11 // pred_fallthru
          _
        // Predicated region
        $region21: #{tpu_custom_call.1} parent=11 // pred_check
          %p220 = pneg %p131
        $region22: #{tpu_custom_call.1} parent=11 // pred_check_branch
          %222 = sbr.rel (%p220) target = $region24
        $region23: #{tpu_custom_call.1} parent=11 // pred_region
          _
        $region24: #{tpu_custom_call.1} parent=11 // pred_fallthru
          _
        // Predicated region
        $region25: #{tpu_custom_call.1} parent=11 // pred_check
          %p223 = pneg %p152
        $region26: #{tpu_custom_call.1} parent=11 // pred_check_branch
          %225 = sbr.rel (%p223) target = $region28
        $region27: #{tpu_custom_call.1} parent=11 // pred_region
          _
        $region28: #{tpu_custom_call.1} parent=11 // pred_fallthru
          _
        // Predicated region
        $region29: #{tpu_custom_call.1} parent=11 // pred_check
          %p226 = pneg %p173
        $region30: #{tpu_custom_call.1} parent=11 // pred_check_branch
          %228 = sbr.rel (%p226) target = $region32
        $region31: #{tpu_custom_call.1} parent=11 // pred_region
          _
        $region32: #{tpu_custom_call.1} parent=11 // pred_fallthru
          _
      $region12: #{tpu_custom_call.1} parent=5 // pred_fallthru
        _
      %p229 = scmp.lt.s32.totalorder %s16, 2
      // Predicated region
      $region33: #{tpu_custom_call.1} parent=5 // pred_check
        %p230 = pneg %p229
      $region34: #{tpu_custom_call.1} parent=5 // pred_check_branch
        %232 = sbr.rel (%p230) target = $region36
      $region35: #{tpu_custom_call.1} parent=5 // pred_region
        // Predicated region
        $region37: #{tpu_custom_call.1} parent=35 // pred_check
          %p233 = pneg %p36
        $region38: #{tpu_custom_call.1} parent=35 // pred_check_branch
          %235 = sbr.rel (%p233) target = $region40
        $region39: #{tpu_custom_call.1} parent=35 // pred_region
          %p236 = scmp.lt.s32.totalorder %s16, 1
          %s237 = scalar_select %p236, %s16, 1
          %s238 = scalar_lea.vmem %s0, %s237
        $region40: #{tpu_custom_call.1} parent=35 // pred_fallthru
          _
        // Predicated region
        $region41: #{tpu_custom_call.1} parent=35 // pred_check
          %p239 = pneg %p62
        $region42: #{tpu_custom_call.1} parent=35 // pred_check_branch
          %241 = sbr.rel (%p239) target = $region44
        $region43: #{tpu_custom_call.1} parent=35 // pred_region
          %p242 = scmp.lt.s32.totalorder %s16, 1
          %s243 = scalar_select %p242, %s16, 1
          %s244 = smul.addr %s243, 8
          %s245 = scalar_lea.vmem %s1, %s244
        $region44: #{tpu_custom_call.1} parent=35 // pred_fallthru
          _
      $region36: #{tpu_custom_call.1} parent=5 // pred_fallthru
        _
      %p246 = scmp.le.s32.totalorder 1, %s16
      %p247 = scmp.lt.s32.totalorder %s16, 3
      %p248 = pnand %p246, %p247
      %p249 = pneg %p248
      // Predicated region
      $region45: #{tpu_custom_call.1} parent=5 // pred_check
        _
      $region46: #{tpu_custom_call.1} parent=5 // pred_check_branch
        %251 = sbr.rel (%p248) target = $region48
      $region47: #{tpu_custom_call.1} parent=5 // pred_region
        %s252 = ssub.s32 %s16, 1
        %p253 = scmp.lt.s32.totalorder %s21, 1
        %s254 = scalar_select %p253, %s21, 1
        %s255 = scalar_lea.vmem %s0, %s254
        %p256 = pneg %p42
        %p257 = pneg %p39
        %p258 = scmp.lt.s32.totalorder %s21, 1
        %s259 = scalar_select %p258, %s21, 1
        %s260 = smul.addr %s259, 8
        %s261 = scalar_lea.vmem %s1, %s260
        %p262 = pneg %p68
        %p263 = pneg %p65
        %p264 = pneg %p89
        %p265 = pneg %p86
        %p266 = pneg %p110
        %p267 = pneg %p107
        %p268 = pneg %p131
        %p269 = pneg %p128
        %p270 = pneg %p152
        %p271 = pneg %p149
        %p272 = pneg %p173
        %p273 = pneg %p170
        %p274 = pneg %p199
        %p275 = pneg %p196
        %s276 = sand.u32 %s186, 1
        %s277 = scalar_lea.sflag [#allocation3], %s276
        %s278 = sand.u32 %s186, 1
        %s279 = smul.addr %s278, 8
        %s280 = scalar_lea.vmem [#allocation2], %s279
        %p281 = scmp.lt.s32.totalorder %s21, 1
        %s282 = scalar_select %p281, %s21, 1
        %s283 = scalar_lea.vmem %s0, %s282
        %p284 = scmp.lt.s32.totalorder %s21, 1
        %s285 = scalar_select %p284, %s21, 1
        %s286 = smul.addr %s285, 8
        %s287 = scalar_lea.vmem %s1, %s286
        %v288 = vld [vmem:[%s287] sm:$0xff]
        %v289 = vld [vmem:[%s283] sm:$0x1]
        %vm290 = vcmp.ne.s32.totalorder %v289, 0
        %v291 = vsel %vm290, -1e+09, 0.0
        %v292 = vld [vmem:[%s6] sm:$0xff]
        %v293 = vld [vmem:[%s6 + $0x8] sm:$0xff]
        %v294 = vld [vmem:[%s6 + $0x10] sm:$0xff]
        %v295 = vld [vmem:[%s2] sm:$0xff]
        %v296 = vld [vmem:[%s2 + $0x8] sm:$0xff]
        %v297 = vld [vmem:[%s2 + $0x10] sm:$0xff]
        %v298 = vld [vmem:[%s2 + $0x18] sm:$0xff]
        %v299 = vld [vmem:[%s2 + $0x20] sm:$0xff]
        %v300 = vld [vmem:[%s2 + $0x28] sm:$0xff]
        %v301 = vld [vmem:[%s2 + $0x30] sm:$0xff]
        %v302 = vld [vmem:[%s2 + $0x38] sm:$0xff]
        %v303 = vld [vmem:[%s2 + $0x40] sm:$0xff]
        %v304 = vld [vmem:[%s2 + $0x48] sm:$0xff]
        %v305 = vld [vmem:[%s2 + $0x50] sm:$0xff]
        %v306 = vld [vmem:[%s2 + $0x58] sm:$0xff]
        %v307 = vld [vmem:[%s3] sm:$0xff]
        %v308 = vld [vmem:[%s3 + $0x8] sm:$0xff]
        %v309 = vld [vmem:[%s3 + $0x10] sm:$0xff]
        %v310 = vld [vmem:[%s3 + $0x18] sm:$0xff]
        %v311 = vlaneseq
        %v312 = vshrl.u32 %v311, 7
        %v313 = vsub.s32 0, %v312
        %v314 = vrot.slane %v292, %v313
        %vm315 = vcmask 261120
        %v317 = vsel %vm315, %v288, 0
        %v320 = vsel %vm315, %v295, 0
        %322 = vmatprep.subr.mxu0 0.0
        %323 = vmatpush1.xpose.msra.mxu0 %v320
        %324 = vmatprep.subr.mxu0 0.0
        %325 = vmatpush1.xpose.msra.mxu0 0.0
        %326 = vmatprep.subr.mxu0 0.0
        %327 = vmatpush1.xpose.msra.mxu0 0.0
        %328 = vmatprep.subr.mxu0 0.0
        %329 = vmatpush1.xpose.msra.mxu0 0.0
        %330 = vmatprep.subr.mxu0 0.0
        %331 = vmatpush1.xpose.msra.mxu0 0.0
        %332 = vmatprep.subr.mxu0 0.0
        %333 = vmatpush1.xpose.msra.mxu0 0.0
        %334 = vmatprep.subr.mxu0 0.0
        %335 = vmatpush1.xpose.msra.mxu0 0.0
        %336 = vmatprep.subr.mxu0 0.0
        %337 = vmatpush1.xpose.msra.mxu0 0.0
        %338 = vmatprep.subr.mxu0 0.0
        %339 = vmatpush1.xpose.msra.mxu0 0.0
        %340 = vmatprep.subr.mxu0 0.0
        %341 = vmatpush1.xpose.msra.mxu0 0.0
        %342 = vmatprep.subr.mxu0 0.0
        %343 = vmatpush1.xpose.msra.mxu0 0.0
        %344 = vmatprep.subr.mxu0 0.0
        %345 = vmatpush1.xpose.msra.mxu0 0.0
        %346 = vmatprep.subr.mxu0 0.0
        %347 = vmatpush1.xpose.msra.mxu0 0.0
        %348 = vmatprep.subr.mxu0 0.0
        %349 = vmatpush1.xpose.msra.mxu0 0.0
        %350 = vmatprep.subr.mxu0 0.0
        %351 = vmatpush1.xpose.msra.mxu0 0.0
        %352 = vmatprep.subr.mxu0 0.0
        %353 = vmatpush1.xpose.msra.mxu0 0.0
        %354 = vmatprep.subr.mxu0 0.0
        %355 = vmatpush1.xpose.msra.mxu0 0.0
        %356 = vmatprep.subr.mxu0 0.0
        %357 = vmatpush1.xpose.msra.mxu0 0.0
        %358 = vmatprep.subr.mxu0 0.0
        %359 = vmatpush1.xpose.msra.mxu0 0.0
        %360 = vmatprep.subr.mxu0 0.0
        %361 = vmatpush1.xpose.msra.mxu0 0.0
        %362 = vmatprep.subr.mxu0 0.0
        %363 = vmatpush1.xpose.msra.mxu0 0.0
        %364 = vmatprep.subr.mxu0 0.0
        %365 = vmatpush1.xpose.msra.mxu0 0.0
        %366 = vmatprep.subr.mxu0 0.0
        %367 = vmatpush1.xpose.msra.mxu0 0.0
        %368 = vmatprep.subr.mxu0 0.0
        %369 = vmatpush1.xpose.msra.mxu0 0.0
        %370 = vmatprep.subr.mxu0 0.0
        %371 = vmatpush1.xpose.msra.mxu0 0.0
        %372 = vmatprep.subr.mxu0 0.0
        %373 = vmatpush1.xpose.msra.mxu0 0.0
        %374 = vmatprep.subr.mxu0 0.0
        %375 = vmatpush1.xpose.msra.mxu0 0.0
        %376 = vmatprep.subr.mxu0 0.0
        %377 = vmatpush1.xpose.msra.mxu0 0.0
        %378 = vmatprep.subr.mxu0 0.0
        %379 = vmatpush1.xpose.msra.mxu0 0.0
        %380 = vmatprep.subr.mxu0 0.0
        %381 = vmatpush1.xpose.msra.mxu0 0.0
        %382 = vmatprep.subr.mxu0 0.0
        %383 = vmatpush1.xpose.msra.mxu0 0.0
        %384 = vmatprep.subr.mxu0 0.0
        %385 = vmatpush1.xpose.msra.mxu0 0.0
        %386 = vmatprep.mubr.f32.mxu0 0.0
        %387 = vmatmul.mubr.f32.gmra.mrb[0].mxu0 %v317
        %v388 = vpop.f32.mrb[0].mxu0
        %v389 = vadd.f32 %v314, %v388
        %v390 = vpop.f32.mrb[0].mxu0
        %391 = vdwg.mxu0
        %v392 = vmul.f32 %v389, 0.35355338
        %v393 = vlaneseq
        %v394 = vshrl.u32 %v393, 7
        %v395 = vsub.s32 4, %v394
        %v396 = vrot.slane %v292, %v395
        %v398 = vsel %vm315, %v299, 0
        %400 = vmatprep.subr.mxu0 0.0
        %401 = vmatpush1.xpose.msra.mxu0 %v398
        %402 = vmatprep.subr.mxu0 0.0
        %403 = vmatpush1.xpose.msra.mxu0 0.0
        %404 = vmatprep.subr.mxu0 0.0
        %405 = vmatpush1.xpose.msra.mxu0 0.0
        %406 = vmatprep.subr.mxu0 0.0
        %407 = vmatpush1.xpose.msra.mxu0 0.0
        %408 = vmatprep.subr.mxu0 0.0
        %409 = vmatpush1.xpose.msra.mxu0 0.0
        %410 = vmatprep.subr.mxu0 0.0
        %411 = vmatpush1.xpose.msra.mxu0 0.0
        %412 = vmatprep.subr.mxu0 0.0
        %413 = vmatpush1.xpose.msra.mxu0 0.0
        %414 = vmatprep.subr.mxu0 0.0
        %415 = vmatpush1.xpose.msra.mxu0 0.0
        %416 = vmatprep.subr.mxu0 0.0
        %417 = vmatpush1.xpose.msra.mxu0 0.0
        %418 = vmatprep.subr.mxu0 0.0
        %419 = vmatpush1.xpose.msra.mxu0 0.0
        %420 = vmatprep.subr.mxu0 0.0
        %421 = vmatpush1.xpose.msra.mxu0 0.0
        %422 = vmatprep.subr.mxu0 0.0
        %423 = vmatpush1.xpose.msra.mxu0 0.0
        %424 = vmatprep.subr.mxu0 0.0
        %425 = vmatpush1.xpose.msra.mxu0 0.0
        %426 = vmatprep.subr.mxu0 0.0
        %427 = vmatpush1.xpose.msra.mxu0 0.0
        %428 = vmatprep.subr.mxu0 0.0
        %429 = vmatpush1.xpose.msra.mxu0 0.0
        %430 = vmatprep.subr.mxu0 0.0
        %431 = vmatpush1.xpose.msra.mxu0 0.0
        %432 = vmatprep.subr.mxu0 0.0
        %433 = vmatpush1.xpose.msra.mxu0 0.0
        %434 = vmatprep.subr.mxu0 0.0
        %435 = vmatpush1.xpose.msra.mxu0 0.0
        %436 = vmatprep.subr.mxu0 0.0
        %437 = vmatpush1.xpose.msra.mxu0 0.0
        %438 = vmatprep.subr.mxu0 0.0
        %439 = vmatpush1.xpose.msra.mxu0 0.0
        %440 = vmatprep.subr.mxu0 0.0
        %441 = vmatpush1.xpose.msra.mxu0 0.0
        %442 = vmatprep.subr.mxu0 0.0
        %443 = vmatpush1.xpose.msra.mxu0 0.0
        %444 = vmatprep.subr.mxu0 0.0
        %445 = vmatpush1.xpose.msra.mxu0 0.0
        %446 = vmatprep.subr.mxu0 0.0
        %447 = vmatpush1.xpose.msra.mxu0 0.0
        %448 = vmatprep.subr.mxu0 0.0
        %449 = vmatpush1.xpose.msra.mxu0 0.0
        %450 = vmatprep.subr.mxu0 0.0
        %451 = vmatpush1.xpose.msra.mxu0 0.0
        %452 = vmatprep.subr.mxu0 0.0
        %453 = vmatpush1.xpose.msra.mxu0 0.0
        %454 = vmatprep.subr.mxu0 0.0
        %455 = vmatpush1.xpose.msra.mxu0 0.0
        %456 = vmatprep.subr.mxu0 0.0
        %457 = vmatpush1.xpose.msra.mxu0 0.0
        %458 = vmatprep.subr.mxu0 0.0
        %459 = vmatpush1.xpose.msra.mxu0 0.0
        %460 = vmatprep.subr.mxu0 0.0
        %461 = vmatpush1.xpose.msra.mxu0 0.0
        %462 = vmatprep.subr.mxu0 0.0
        %463 = vmatpush1.xpose.msra.mxu0 0.0
        %464 = vmatprep.mubr.f32.mxu0 0.0
        %465 = vmatmul.mubr.f32.gmra.mrb[0].mxu0 %v317
        %v466 = vpop.f32.mrb[0].mxu0
        %v467 = vadd.f32 %v396, %v466
        %v468 = vpop.f32.mrb[0].mxu0
        %469 = vdwg.mxu0
        %v470 = vlaneseq
        %v471 = vshrl.u32 %v470, 7
        %v472 = vsub.s32 0, %v471
        %v473 = vrot.slane %v293, %v472
        %v475 = vsel %vm315, %v303, 0
        %477 = vmatprep.subr.mxu0 0.0
        %478 = vmatpush1.xpose.msra.mxu0 %v475
        %479 = vmatprep.subr.mxu0 0.0
        %480 = vmatpush1.xpose.msra.mxu0 0.0
        %481 = vmatprep.subr.mxu0 0.0
        %482 = vmatpush1.xpose.msra.mxu0 0.0
        %483 = vmatprep.subr.mxu0 0.0
        %484 = vmatpush1.xpose.msra.mxu0 0.0
        %485 = vmatprep.subr.mxu0 0.0
        %486 = vmatpush1.xpose.msra.mxu0 0.0
        %487 = vmatprep.subr.mxu0 0.0
        %488 = vmatpush1.xpose.msra.mxu0 0.0
        %489 = vmatprep.subr.mxu0 0.0
        %490 = vmatpush1.xpose.msra.mxu0 0.0
        %491 = vmatprep.subr.mxu0 0.0
        %492 = vmatpush1.xpose.msra.mxu0 0.0
        %493 = vmatprep.subr.mxu0 0.0
        %494 = vmatpush1.xpose.msra.mxu0 0.0
        %495 = vmatprep.subr.mxu0 0.0
        %496 = vmatpush1.xpose.msra.mxu0 0.0
        %497 = vmatprep.subr.mxu0 0.0
        %498 = vmatpush1.xpose.msra.mxu0 0.0
        %499 = vmatprep.subr.mxu0 0.0
        %500 = vmatpush1.xpose.msra.mxu0 0.0
        %501 = vmatprep.subr.mxu0 0.0
        %502 = vmatpush1.xpose.msra.mxu0 0.0
        %503 = vmatprep.subr.mxu0 0.0
        %504 = vmatpush1.xpose.msra.mxu0 0.0
        %505 = vmatprep.subr.mxu0 0.0
        %506 = vmatpush1.xpose.msra.mxu0 0.0
        %507 = vmatprep.subr.mxu0 0.0
        %508 = vmatpush1.xpose.msra.mxu0 0.0
        %509 = vmatprep.subr.mxu0 0.0
        %510 = vmatpush1.xpose.msra.mxu0 0.0
        %511 = vmatprep.subr.mxu0 0.0
        %512 = vmatpush1.xpose.msra.mxu0 0.0
        %513 = vmatprep.subr.mxu0 0.0
        %514 = vmatpush1.xpose.msra.mxu0 0.0
        %515 = vmatprep.subr.mxu0 0.0
        %516 = vmatpush1.xpose.msra.mxu0 0.0
        %517 = vmatprep.subr.mxu0 0.0
        %518 = vmatpush1.xpose.msra.mxu0 0.0
        %519 = vmatprep.subr.mxu0 0.0
        %520 = vmatpush1.xpose.msra.mxu0 0.0
        %521 = vmatprep.subr.mxu0 0.0
        %522 = vmatpush1.xpose.msra.mxu0 0.0
        %523 = vmatprep.subr.mxu0 0.0
        %524 = vmatpush1.xpose.msra.mxu0 0.0
        %525 = vmatprep.subr.mxu0 0.0
        %526 = vmatpush1.xpose.msra.mxu0 0.0
        %527 = vmatprep.subr.mxu0 0.0
        %528 = vmatpush1.xpose.msra.mxu0 0.0
        %529 = vmatprep.subr.mxu0 0.0
        %530 = vmatpush1.xpose.msra.mxu0 0.0
        %531 = vmatprep.subr.mxu0 0.0
        %532 = vmatpush1.xpose.msra.mxu0 0.0
        %533 = vmatprep.subr.mxu0 0.0
        %534 = vmatpush1.xpose.msra.mxu0 0.0
        %535 = vmatprep.subr.mxu0 0.0
        %536 = vmatpush1.xpose.msra.mxu0 0.0
        %537 = vmatprep.subr.mxu0 0.0
        %538 = vmatpush1.xpose.msra.mxu0 0.0
        %539 = vmatprep.subr.mxu0 0.0
        %540 = vmatpush1.xpose.msra.mxu0 0.0
        %541 = vmatprep.mubr.f32.mxu0 0.0
        %542 = vmatmul.mubr.f32.gmra.mrb[0].mxu0 %v317
        %v543 = vpop.f32.mrb[0].mxu0
        %v544 = vadd.f32 %v473, %v543
        %v545 = vpop.f32.mrb[0].mxu0
        %546 = vdwg.mxu0
        %vm547 = vcmask 64512
        %v549 = vsel %vm547, %v392, 0
        %v552 = vsel %vm547, %v467, 0
        %554 = vmatprep.subr.mxu0 0.0
        %555 = vmatpush1.xpose.msra.mxu0 %v552
        %556 = vmatprep.subr.mxu0 0.0
        %557 = vmatpush1.xpose.msra.mxu0 0.0
        %558 = vmatprep.subr.mxu0 0.0
        %559 = vmatpush1.xpose.msra.mxu0 0.0
        %560 = vmatprep.subr.mxu0 0.0
        %561 = vmatpush1.xpose.msra.mxu0 0.0
        %562 = vmatprep.subr.mxu0 0.0
        %563 = vmatpush1.xpose.msra.mxu0 0.0
        %564 = vmatprep.subr.mxu0 0.0
        %565 = vmatpush1.xpose.msra.mxu0 0.0
        %566 = vmatprep.subr.mxu0 0.0
        %567 = vmatpush1.xpose.msra.mxu0 0.0
        %568 = vmatprep.subr.mxu0 0.0
        %569 = vmatpush1.xpose.msra.mxu0 0.0
        %570 = vmatprep.subr.mxu0 0.0
        %571 = vmatpush1.xpose.msra.mxu0 0.0
        %572 = vmatprep.subr.mxu0 0.0
        %573 = vmatpush1.xpose.msra.mxu0 0.0
        %574 = vmatprep.subr.mxu0 0.0
        %575 = vmatpush1.xpose.msra.mxu0 0.0
        %576 = vmatprep.subr.mxu0 0.0
        %577 = vmatpush1.xpose.msra.mxu0 0.0
        %578 = vmatprep.subr.mxu0 0.0
        %579 = vmatpush1.xpose.msra.mxu0 0.0
        %580 = vmatprep.subr.mxu0 0.0
        %581 = vmatpush1.xpose.msra.mxu0 0.0
        %582 = vmatprep.subr.mxu0 0.0
        %583 = vmatpush1.xpose.msra.mxu0 0.0
        %584 = vmatprep.subr.mxu0 0.0
        %585 = vmatpush1.xpose.msra.mxu0 0.0
        %586 = vmatprep.subr.mxu0 0.0
        %587 = vmatpush1.xpose.msra.mxu0 0.0
        %588 = vmatprep.subr.mxu0 0.0
        %589 = vmatpush1.xpose.msra.mxu0 0.0
        %590 = vmatprep.subr.mxu0 0.0
        %591 = vmatpush1.xpose.msra.mxu0 0.0
        %592 = vmatprep.subr.mxu0 0.0
        %593 = vmatpush1.xpose.msra.mxu0 0.0
        %594 = vmatprep.subr.mxu0 0.0
        %595 = vmatpush1.xpose.msra.mxu0 0.0
        %596 = vmatprep.subr.mxu0 0.0
        %597 = vmatpush1.xpose.msra.mxu0 0.0
        %598 = vmatprep.subr.mxu0 0.0
        %599 = vmatpush1.xpose.msra.mxu0 0.0
        %600 = vmatprep.subr.mxu0 0.0
        %601 = vmatpush1.xpose.msra.mxu0 0.0
        %602 = vmatprep.subr.mxu0 0.0
        %603 = vmatpush1.xpose.msra.mxu0 0.0
        %604 = vmatprep.subr.mxu0 0.0
        %605 = vmatpush1.xpose.msra.mxu0 0.0
        %606 = vmatprep.subr.mxu0 0.0
        %607 = vmatpush1.xpose.msra.mxu0 0.0
        %608 = vmatprep.subr.mxu0 0.0
        %609 = vmatpush1.xpose.msra.mxu0 0.0
        %610 = vmatprep.subr.mxu0 0.0
        %611 = vmatpush1.xpose.msra.mxu0 0.0
        %612 = vmatprep.subr.mxu0 0.0
        %613 = vmatpush1.xpose.msra.mxu0 0.0
        %614 = vmatprep.subr.mxu0 0.0
        %615 = vmatpush1.xpose.msra.mxu0 0.0
        %616 = vmatprep.subr.mxu0 0.0
        %617 = vmatpush1.xpose.msra.mxu0 0.0
        %618 = vmatprep.mubr.f32.mxu0 0.0
        %619 = vmatmul.mubr.f32.gmra.mrb[0].mxu0 %v549
        %v620 = vpop.f32.mrb[0].mxu0
        %v621 = vadd.f32 0.0, %v620
        %v622 = vpop.f32.mrb[0].mxu0
        %623 = vdwg.mxu0
        %v624 = vlaneseq
        %v625 = vshrl.u32 %v624, 7
        %v626 = vsub.s32 1, %v625
        %v627 = vrot.slane %v292, %v626
        %v629 = vsel %vm315, %v296, 0
        %631 = vmatprep.subr.mxu0 0.0
        %632 = vmatpush1.xpose.msra.mxu0 %v629
        %633 = vmatprep.subr.mxu0 0.0
        %634 = vmatpush1.xpose.msra.mxu0 0.0
        %635 = vmatprep.subr.mxu0 0.0
        %636 = vmatpush1.xpose.msra.mxu0 0.0
        %637 = vmatprep.subr.mxu0 0.0
        %638 = vmatpush1.xpose.msra.mxu0 0.0
        %639 = vmatprep.subr.mxu0 0.0
        %640 = vmatpush1.xpose.msra.mxu0 0.0
        %641 = vmatprep.subr.mxu0 0.0
        %642 = vmatpush1.xpose.msra.mxu0 0.0
        %643 = vmatprep.subr.mxu0 0.0
        %644 = vmatpush1.xpose.msra.mxu0 0.0
        %645 = vmatprep.subr.mxu0 0.0
        %646 = vmatpush1.xpose.msra.mxu0 0.0
        %647 = vmatprep.subr.mxu0 0.0
        %648 = vmatpush1.xpose.msra.mxu0 0.0
        %649 = vmatprep.subr.mxu0 0.0
        %650 = vmatpush1.xpose.msra.mxu0 0.0
        %651 = vmatprep.subr.mxu0 0.0
        %652 = vmatpush1.xpose.msra.mxu0 0.0
        %653 = vmatprep.subr.mxu0 0.0
        %654 = vmatpush1.xpose.msra.mxu0 0.0
        %655 = vmatprep.subr.mxu0 0.0
        %656 = vmatpush1.xpose.msra.mxu0 0.0
        %657 = vmatprep.subr.mxu0 0.0
        %658 = vmatpush1.xpose.msra.mxu0 0.0
        %659 = vmatprep.subr.mxu0 0.0
        %660 = vmatpush1.xpose.msra.mxu0 0.0
        %661 = vmatprep.subr.mxu0 0.0
        %662 = vmatpush1.xpose.msra.mxu0 0.0
        %663 = vmatprep.subr.mxu0 0.0
        %664 = vmatpush1.xpose.msra.mxu0 0.0
        %665 = vmatprep.subr.mxu0 0.0
        %666 = vmatpush1.xpose.msra.mxu0 0.0
        %667 = vmatprep.subr.mxu0 0.0
        %668 = vmatpush1.xpose.msra.mxu0 0.0
        %669 = vmatprep.subr.mxu0 0.0
        %670 = vmatpush1.xpose.msra.mxu0 0.0
        %671 = vmatprep.subr.mxu0 0.0
        %672 = vmatpush1.xpose.msra.mxu0 0.0
        %673 = vmatprep.subr.mxu0 0.0
        %674 = vmatpush1.xpose.msra.mxu0 0.0
        %675 = vmatprep.subr.mxu0 0.0
        %676 = vmatpush1.xpose.msra.mxu0 0.0
        %677 = vmatprep.subr.mxu0 0.0
        %678 = vmatpush1.xpose.msra.mxu0 0.0
        %679 = vmatprep.subr.mxu0 0.0
        %680 = vmatpush1.xpose.msra.mxu0 0.0
        %681 = vmatprep.subr.mxu0 0.0
        %682 = vmatpush1.xpose.msra.mxu0 0.0
        %683 = vmatprep.subr.mxu0 0.0
        %684 = vmatpush1.xpose.msra.mxu0 0.0
        %685 = vmatprep.subr.mxu0 0.0
        %686 = vmatpush1.xpose.msra.mxu0 0.0
        %687 = vmatprep.subr.mxu0 0.0
        %688 = vmatpush1.xpose.msra.mxu0 0.0
        %689 = vmatprep.subr.mxu0 0.0
        %690 = vmatpush1.xpose.msra.mxu0 0.0
        %691 = vmatprep.subr.mxu0 0.0
        %692 = vmatpush1.xpose.msra.mxu0 0.0
        %693 = vmatprep.subr.mxu0 0.0
        %694 = vmatpush1.xpose.msra.mxu0 0.0
        %695 = vmatprep.mubr.f32.mxu0 0.0
        %696 = vmatmul.mubr.f32.gmra.mrb[0].mxu0 %v317
        %v697 = vpop.f32.mrb[0].mxu0
        %v698 = vadd.f32 %v627, %v697
        %v699 = vpop.f32.mrb[0].mxu0
        %700 = vdwg.mxu0
        %v701 = vmul.f32 %v698, 0.35355338
        %v702 = vlaneseq
        %v703 = vshrl.u32 %v702, 7
        %v704 = vsub.s32 5, %v703
        %v705 = vrot.slane %v292, %v704
        %v707 = vsel %vm315, %v300, 0
        %709 = vmatprep.subr.mxu0 0.0
        %710 = vmatpush1.xpose.msra.mxu0 %v707
        %711 = vmatprep.subr.mxu0 0.0
        %712 = vmatpush1.xpose.msra.mxu0 0.0
        %713 = vmatprep.subr.mxu0 0.0
        %714 = vmatpush1.xpose.msra.mxu0 0.0
        %715 = vmatprep.subr.mxu0 0.0
        %716 = vmatpush1.xpose.msra.mxu0 0.0
        %717 = vmatprep.subr.mxu0 0.0
        %718 = vmatpush1.xpose.msra.mxu0 0.0
        %719 = vmatprep.subr.mxu0 0.0
        %720 = vmatpush1.xpose.msra.mxu0 0.0
        %721 = vmatprep.subr.mxu0 0.0
        %722 = vmatpush1.xpose.msra.mxu0 0.0
        %723 = vmatprep.subr.mxu0 0.0
        %724 = vmatpush1.xpose.msra.mxu0 0.0
        %725 = vmatprep.subr.mxu0 0.0
        %726 = vmatpush1.xpose.msra.mxu0 0.0
        %727 = vmatprep.subr.mxu0 0.0
        %728 = vmatpush1.xpose.msra.mxu0 0.0
        %729 = vmatprep.subr.mxu0 0.0
        %730 = vmatpush1.xpose.msra.mxu0 0.0
        %731 = vmatprep.subr.mxu0 0.0
        %732 = vmatpush1.xpose.msra.mxu0 0.0
        %733 = vmatprep.subr.mxu0 0.0
        %734 = vmatpush1.xpose.msra.mxu0 0.0
        %735 = vmatprep.subr.mxu0 0.0
        %736 = vmatpush1.xpose.msra.mxu0 0.0
        %737 = vmatprep.subr.mxu0 0.0
        %738 = vmatpush1.xpose.msra.mxu0 0.0
        %739 = vmatprep.subr.mxu0 0.0
        %740 = vmatpush1.xpose.msra.mxu0 0.0
        %741 = vmatprep.subr.mxu0 0.0
        %742 = vmatpush1.xpose.msra.mxu0 0.0
        %743 = vmatprep.subr.mxu0 0.0
        %744 = vmatpush1.xpose.msra.mxu0 0.0
        %745 = vmatprep.subr.mxu0 0.0
        %746 = vmatpush1.xpose.msra.mxu0 0.0
        %747 = vmatprep.subr.mxu0 0.0
        %748 = vmatpush1.xpose.msra.mxu0 0.0
        %749 = vmatprep.subr.mxu0 0.0
        %750 = vmatpush1.xpose.msra.mxu0 0.0
        %751 = vmatprep.subr.mxu0 0.0
        %752 = vmatpush1.xpose.msra.mxu0 0.0
        %753 = vmatprep.subr.mxu0 0.0
        %754 = vmatpush1.xpose.msra.mxu0 0.0
        %755 = vmatprep.subr.mxu0 0.0
        %756 = vmatpush1.xpose.msra.mxu0 0.0
        %757 = vmatprep.subr.mxu0 0.0
        %758 = vmatpush1.xpose.msra.mxu0 0.0
        %759 = vmatprep.subr.mxu0 0.0
        %760 = vmatpush1.xpose.msra.mxu0 0.0
        %761 = vmatprep.subr.mxu0 0.0
        %762 = vmatpush1.xpose.msra.mxu0 0.0
        %763 = vmatprep.subr.mxu0 0.0
        %764 = vmatpush1.xpose.msra.mxu0 0.0
        %765 = vmatprep.subr.mxu0 0.0
        %766 = vmatpush1.xpose.msra.mxu0 0.0
        %767 = vmatprep.subr.mxu0 0.0
        %768 = vmatpush1.xpose.msra.mxu0 0.0
        %769 = vmatprep.subr.mxu0 0.0
        %770 = vmatpush1.xpose.msra.mxu0 0.0
        %771 = vmatprep.subr.mxu0 0.0
        %772 = vmatpush1.xpose.msra.mxu0 0.0
        %773 = vmatprep.mubr.f32.mxu0 0.0
        %774 = vmatmul.mubr.f32.gmra.mrb[0].mxu0 %v317
        %v775 = vpop.f32.mrb[0].mxu0
        %v776 = vadd.f32 %v705, %v775
        %v777 = vpop.f32.mrb[0].mxu0
        %778 = vdwg.mxu0
        %v779 = vlaneseq
        %v780 = vshrl.u32 %v779, 7
        %v781 = vsub.s32 1, %v780
        %v782 = vrot.slane %v293, %v781
        %v784 = vsel %vm315, %v304, 0
        %786 = vmatprep.subr.mxu0 0.0
        %787 = vmatpush1.xpose.msra.mxu0 %v784
        %788 = vmatprep.subr.mxu0 0.0
        %789 = vmatpush1.xpose.msra.mxu0 0.0
        %790 = vmatprep.subr.mxu0 0.0
        %791 = vmatpush1.xpose.msra.mxu0 0.0
        %792 = vmatprep.subr.mxu0 0.0
        %793 = vmatpush1.xpose.msra.mxu0 0.0
        %794 = vmatprep.subr.mxu0 0.0
        %795 = vmatpush1.xpose.msra.mxu0 0.0
        %796 = vmatprep.subr.mxu0 0.0
        %797 = vmatpush1.xpose.msra.mxu0 0.0
        %798 = vmatprep.subr.mxu0 0.0
        %799 = vmatpush1.xpose.msra.mxu0 0.0
        %800 = vmatprep.subr.mxu0 0.0
        %801 = vmatpush1.xpose.msra.mxu0 0.0
        %802 = vmatprep.subr.mxu0 0.0
        %803 = vmatpush1.xpose.msra.mxu0 0.0
        %804 = vmatprep.subr.mxu0 0.0
        %805 = vmatpush1.xpose.msra.mxu0 0.0
        %806 = vmatprep.subr.mxu0 0.0
        %807 = vmatpush1.xpose.msra.mxu0 0.0
        %808 = vmatprep.subr.mxu0 0.0
        %809 = vmatpush1.xpose.msra.mxu0 0.0
        %810 = vmatprep.subr.mxu0 0.0
        %811 = vmatpush1.xpose.msra.mxu0 0.0
        %812 = vmatprep.subr.mxu0 0.0
        %813 = vmatpush1.xpose.msra.mxu0 0.0
        %814 = vmatprep.subr.mxu0 0.0
        %815 = vmatpush1.xpose.msra.mxu0 0.0
        %816 = vmatprep.subr.mxu0 0.0
        %817 = vmatpush1.xpose.msra.mxu0 0.0
        %818 = vmatprep.subr.mxu0 0.0
        %819 = vmatpush1.xpose.msra.mxu0 0.0
        %820 = vmatprep.subr.mxu0 0.0
        %821 = vmatpush1.xpose.msra.mxu0 0.0
        %822 = vmatprep.subr.mxu0 0.0
        %823 = vmatpush1.xpose.msra.mxu0 0.0
        %824 = vmatprep.subr.mxu0 0.0
        %825 = vmatpush1.xpose.msra.mxu0 0.0
        %826 = vmatprep.subr.mxu0 0.0
        %827 = vmatpush1.xpose.msra.mxu0 0.0
        %828 = vmatprep.subr.mxu0 0.0
        %829 = vmatpush1.xpose.msra.mxu0 0.0
        %830 = vmatprep.subr.mxu0 0.0
        %831 = vmatpush1.xpose.msra.mxu0 0.0
        %832 = vmatprep.subr.mxu0 0.0
        %833 = vmatpush1.xpose.msra.mxu0 0.0
        %834 = vmatprep.subr.mxu0 0.0
        %835 = vmatpush1.xpose.msra.mxu0 0.0
        %836 = vmatprep.subr.mxu0 0.0
        %837 = vmatpush1.xpose.msra.mxu0 0.0
        %838 = vmatprep.subr.mxu0 0.0
        %839 = vmatpush1.xpose.msra.mxu0 0.0
        %840 = vmatprep.subr.mxu0 0.0
        %841 = vmatpush1.xpose.msra.mxu0 0.0
        %842 = vmatprep.subr.mxu0 0.0
        %843 = vmatpush1.xpose.msra.mxu0 0.0
        %844 = vmatprep.subr.mxu0 0.0
        %845 = vmatpush1.xpose.msra.mxu0 0.0
        %846 = vmatprep.subr.mxu0 0.0
        %847 = vmatpush1.xpose.msra.mxu0 0.0
        %848 = vmatprep.subr.mxu0 0.0
        %849 = vmatpush1.xpose.msra.mxu0 0.0
        %850 = vmatprep.mubr.f32.mxu0 0.0
        %851 = vmatmul.mubr.f32.gmra.mrb[0].mxu0 %v317
        %v852 = vpop.f32.mrb[0].mxu0
        %v853 = vadd.f32 %v782, %v852
        %v854 = vpop.f32.mrb[0].mxu0
        %855 = vdwg.mxu0
        %v857 = vsel %vm547, %v701, 0
        %v860 = vsel %vm547, %v776, 0
        %862 = vmatprep.subr.mxu0 0.0
        %863 = vmatpush1.xpose.msra.mxu0 %v860
        %864 = vmatprep.subr.mxu0 0.0
        %865 = vmatpush1.xpose.msra.mxu0 0.0
        %866 = vmatprep.subr.mxu0 0.0
        %867 = vmatpush1.xpose.msra.mxu0 0.0
        %868 = vmatprep.subr.mxu0 0.0
        %869 = vmatpush1.xpose.msra.mxu0 0.0
        %870 = vmatprep.subr.mxu0 0.0
        %871 = vmatpush1.xpose.msra.mxu0 0.0
        %872 = vmatprep.subr.mxu0 0.0
        %873 = vmatpush1.xpose.msra.mxu0 0.0
        %874 = vmatprep.subr.mxu0 0.0
        %875 = vmatpush1.xpose.msra.mxu0 0.0
        %876 = vmatprep.subr.mxu0 0.0
        %877 = vmatpush1.xpose.msra.mxu0 0.0
        %878 = vmatprep.subr.mxu0 0.0
        %879 = vmatpush1.xpose.msra.mxu0 0.0
        %880 = vmatprep.subr.mxu0 0.0
        %881 = vmatpush1.xpose.msra.mxu0 0.0
        %882 = vmatprep.subr.mxu0 0.0
        %883 = vmatpush1.xpose.msra.mxu0 0.0
        %884 = vmatprep.subr.mxu0 0.0
        %885 = vmatpush1.xpose.msra.mxu0 0.0
        %886 = vmatprep.subr.mxu0 0.0
        %887 = vmatpush1.xpose.msra.mxu0 0.0
        %888 = vmatprep.subr.mxu0 0.0
        %889 = vmatpush1.xpose.msra.mxu0 0.0
        %890 = vmatprep.subr.mxu0 0.0
        %891 = vmatpush1.xpose.msra.mxu0 0.0
        %892 = vmatprep.subr.mxu0 0.0
        %893 = vmatpush1.xpose.msra.mxu0 0.0
        %894 = vmatprep.subr.mxu0 0.0
        %895 = vmatpush1.xpose.msra.mxu0 0.0
        %896 = vmatprep.subr.mxu0 0.0
        %897 = vmatpush1.xpose.msra.mxu0 0.0
        %898 = vmatprep.subr.mxu0 0.0
        %899 = vmatpush1.xpose.msra.mxu0 0.0
        %900 = vmatprep.subr.mxu0 0.0
        %901 = vmatpush1.xpose.msra.mxu0 0.0
        %902 = vmatprep.subr.mxu0 0.0
        %903 = vmatpush1.xpose.msra.mxu0 0.0
        %904 = vmatprep.subr.mxu0 0.0
        %905 = vmatpush1.xpose.msra.mxu0 0.0
        %906 = vmatprep.subr.mxu0 0.0
        %907 = vmatpush1.xpose.msra.mxu0 0.0
        %908 = vmatprep.subr.mxu0 0.0
        %909 = vmatpush1.xpose.msra.mxu0 0.0
        %910 = vmatprep.subr.mxu0 0.0
        %911 = vmatpush1.xpose.msra.mxu0 0.0
        %912 = vmatprep.subr.mxu0 0.0
        %913 = vmatpush1.xpose.msra.mxu0 0.0
        %914 = vmatprep.subr.mxu0 0.0
        %915 = vmatpush1.xpose.msra.mxu0 0.0
        %916 = vmatprep.subr.mxu0 0.0
        %917 = vmatpush1.xpose.msra.mxu0 0.0
        %918 = vmatprep.subr.mxu0 0.0
        %919 = vmatpush1.xpose.msra.mxu0 0.0
        %920 = vmatprep.subr.mxu0 0.0
        %921 = vmatpush1.xpose.msra.mxu0 0.0
        %922 = vmatprep.subr.mxu0 0.0
        %923 = vmatpush1.xpose.msra.mxu0 0.0
        %924 = vmatprep.subr.mxu0 0.0
        %925 = vmatpush1.xpose.msra.mxu0 0.0
        %926 = vmatprep.mubr.f32.mxu0 0.0
        %927 = vmatmul.mubr.f32.gmra.mrb[0].mxu0 %v857
        %v928 = vpop.f32.mrb[0].mxu0
        %v929 = vadd.f32 0.0, %v928
        %v930 = vpop.f32.mrb[0].mxu0
        %931 = vdwg.mxu0
        %v932 = vlaneseq
        %v933 = vshrl.u32 %v932, 7
        %v934 = vsub.s32 2, %v933
        %v935 = vrot.slane %v292, %v934
        %v937 = vsel %vm315, %v297, 0
        %939 = vmatprep.subr.mxu0 0.0
        %940 = vmatpush1.xpose.msra.mxu0 %v937
        %941 = vmatprep.subr.mxu0 0.0
        %942 = vmatpush1.xpose.msra.mxu0 0.0
        %943 = vmatprep.subr.mxu0 0.0
        %944 = vmatpush1.xpose.msra.mxu0 0.0
        %945 = vmatprep.subr.mxu0 0.0
        %946 = vmatpush1.xpose.msra.mxu0 0.0
        %947 = vmatprep.subr.mxu0 0.0
        %948 = vmatpush1.xpose.msra.mxu0 0.0
        %949 = vmatprep.subr.mxu0 0.0
        %950 = vmatpush1.xpose.msra.mxu0 0.0
        %951 = vmatprep.subr.mxu0 0.0
        %952 = vmatpush1.xpose.msra.mxu0 0.0
        %953 = vmatprep.subr.mxu0 0.0
        %954 = vmatpush1.xpose.msra.mxu0 0.0
        %955 = vmatprep.subr.mxu0 0.0
        %956 = vmatpush1.xpose.msra.mxu0 0.0
        %957 = vmatprep.subr.mxu0 0.0
        %958 = vmatpush1.xpose.msra.mxu0 0.0
        %959 = vmatprep.subr.mxu0 0.0
        %960 = vmatpush1.xpose.msra.mxu0 0.0
        %961 = vmatprep.subr.mxu0 0.0
        %962 = vmatpush1.xpose.msra.mxu0 0.0
        %963 = vmatprep.subr.mxu0 0.0
        %964 = vmatpush1.xpose.msra.mxu0 0.0
        %965 = vmatprep.subr.mxu0 0.0
        %966 = vmatpush1.xpose.msra.mxu0 0.0
        %967 = vmatprep.subr.mxu0 0.0
        %968 = vmatpush1.xpose.msra.mxu0 0.0
        %969 = vmatprep.subr.mxu0 0.0
        %970 = vmatpush1.xpose.msra.mxu0 0.0
        %971 = vmatprep.subr.mxu0 0.0
        %972 = vmatpush1.xpose.msra.mxu0 0.0
        %973 = vmatprep.subr.mxu0 0.0
        %974 = vmatpush1.xpose.msra.mxu0 0.0
        %975 = vmatprep.subr.mxu0 0.0
        %976 = vmatpush1.xpose.msra.mxu0 0.0
        %977 = vmatprep.subr.mxu0 0.0
        %978 = vmatpush1.xpose.msra.mxu0 0.0
        %979 = vmatprep.subr.mxu0 0.0
        %980 = vmatpush1.xpose.msra.mxu0 0.0
        %981 = vmatprep.subr.mxu0 0.0
        %982 = vmatpush1.xpose.msra.mxu0 0.0
        %983 = vmatprep.subr.mxu0 0.0
        %984 = vmatpush1.xpose.msra.mxu0 0.0
        %985 = vmatprep.subr.mxu0 0.0
        %986 = vmatpush1.xpose.msra.mxu0 0.0
        %987 = vmatprep.subr.mxu0 0.0
        %988 = vmatpush1.xpose.msra.mxu0 0.0
        %989 = vmatprep.subr.mxu0 0.0
        %990 = vmatpush1.xpose.msra.mxu0 0.0
        %991 = vmatprep.subr.mxu0 0.0
        %992 = vmatpush1.xpose.msra.mxu0 0.0
        %993 = vmatprep.subr.mxu0 0.0
        %994 = vmatpush1.xpose.msra.mxu0 0.0
        %995 = vmatprep.subr.mxu0 0.0
        %996 = vmatpush1.xpose.msra.mxu0 0.0
        %997 = vmatprep.subr.mxu0 0.0
        %998 = vmatpush1.xpose.msra.mxu0 0.0
        %999 = vmatprep.subr.mxu0 0.0
        %1000 = vmatpush1.xpose.msra.mxu0 0.0
        %1001 = vmatprep.subr.mxu0 0.0
        %1002 = vmatpush1.xpose.msra.mxu0 0.0
        %1003 = vmatprep.mubr.f32.mxu0 0.0
        %1004 = vmatmul.mubr.f32.gmra.mrb[0].mxu0 %v317
        %v1005 = vpop.f32.mrb[0].mxu0
        %v1006 = vadd.f32 %v935, %v1005
        %v1007 = vpop.f32.mrb[0].mxu0
        %1008 = vdwg.mxu0
        %v1009 = vmul.f32 %v1006, 0.35355338
        %v1010 = vlaneseq
        %v1011 = vshrl.u32 %v1010, 7
        %v1012 = vsub.s32 6, %v1011
        %v1013 = vrot.slane %v292, %v1012
        %v1015 = vsel %vm315, %v301, 0
        %1017 = vmatprep.subr.mxu0 0.0
        %1018 = vmatpush1.xpose.msra.mxu0 %v1015
        %1019 = vmatprep.subr.mxu0 0.0
        %1020 = vmatpush1.xpose.msra.mxu0 0.0
        %1021 = vmatprep.subr.mxu0 0.0
        %1022 = vmatpush1.xpose.msra.mxu0 0.0
        %1023 = vmatprep.subr.mxu0 0.0
        %1024 = vmatpush1.xpose.msra.mxu0 0.0
        %1025 = vmatprep.subr.mxu0 0.0
        %1026 = vmatpush1.xpose.msra.mxu0 0.0
        %1027 = vmatprep.subr.mxu0 0.0
        %1028 = vmatpush1.xpose.msra.mxu0 0.0
        %1029 = vmatprep.subr.mxu0 0.0
        %1030 = vmatpush1.xpose.msra.mxu0 0.0
        %1031 = vmatprep.subr.mxu0 0.0
        %1032 = vmatpush1.xpose.msra.mxu0 0.0
        %1033 = vmatprep.subr.mxu0 0.0
        %1034 = vmatpush1.xpose.msra.mxu0 0.0
        %1035 = vmatprep.subr.mxu0 0.0
        %1036 = vmatpush1.xpose.msra.mxu0 0.0
        %1037 = vmatprep.subr.mxu0 0.0
        %1038 = vmatpush1.xpose.msra.mxu0 0.0
        %1039 = vmatprep.subr.mxu0 0.0
        %1040 = vmatpush1.xpose.msra.mxu0 0.0
        %1041 = vmatprep.subr.mxu0 0.0
        %1042 = vmatpush1.xpose.msra.mxu0 0.0
        %1043 = vmatprep.subr.mxu0 0.0
        %1044 = vmatpush1.xpose.msra.mxu0 0.0
        %1045 = vmatprep.subr.mxu0 0.0
        %1046 = vmatpush1.xpose.msra.mxu0 0.0
        %1047 = vmatprep.subr.mxu0 0.0
        %1048 = vmatpush1.xpose.msra.mxu0 0.0
        %1049 = vmatprep.subr.mxu0 0.0
        %1050 = vmatpush1.xpose.msra.mxu0 0.0
        %1051 = vmatprep.subr.mxu0 0.0
        %1052 = vmatpush1.xpose.msra.mxu0 0.0
        %1053 = vmatprep.subr.mxu0 0.0
        %1054 = vmatpush1.xpose.msra.mxu0 0.0
        %1055 = vmatprep.subr.mxu0 0.0
        %1056 = vmatpush1.xpose.msra.mxu0 0.0
        %1057 = vmatprep.subr.mxu0 0.0
        %1058 = vmatpush1.xpose.msra.mxu0 0.0
        %1059 = vmatprep.subr.mxu0 0.0
        %1060 = vmatpush1.xpose.msra.mxu0 0.0
        %1061 = vmatprep.subr.mxu0 0.0
        %1062 = vmatpush1.xpose.msra.mxu0 0.0
        %1063 = vmatprep.subr.mxu0 0.0
        %1064 = vmatpush1.xpose.msra.mxu0 0.0
        %1065 = vmatprep.subr.mxu0 0.0
        %1066 = vmatpush1.xpose.msra.mxu0 0.0
        %1067 = vmatprep.subr.mxu0 0.0
        %1068 = vmatpush1.xpose.msra.mxu0 0.0
        %1069 = vmatprep.subr.mxu0 0.0
        %1070 = vmatpush1.xpose.msra.mxu0 0.0
        %1071 = vmatprep.subr.mxu0 0.0
        %1072 = vmatpush1.xpose.msra.mxu0 0.0
        %1073 = vmatprep.subr.mxu0 0.0
        %1074 = vmatpush1.xpose.msra.mxu0 0.0
        %1075 = vmatprep.subr.mxu0 0.0
        %1076 = vmatpush1.xpose.msra.mxu0 0.0
        %1077 = vmatprep.subr.mxu0 0.0
        %1078 = vmatpush1.xpose.msra.mxu0 0.0
        %1079 = vmatprep.subr.mxu0 0.0
        %1080 = vmatpush1.xpose.msra.mxu0 0.0
        %1081 = vmatprep.mubr.f32.mxu0 0.0
        %1082 = vmatmul.mubr.f32.gmra.mrb[0].mxu0 %v317
        %v1083 = vpop.f32.mrb[0].mxu0
        %v1084 = vadd.f32 %v1013, %v1083
        %v1085 = vpop.f32.mrb[0].mxu0
        %1086 = vdwg.mxu0
        %v1087 = vlaneseq
        %v1088 = vshrl.u32 %v1087, 7
        %v1089 = vsub.s32 2, %v1088
        %v1090 = vrot.slane %v293, %v1089
        %v1092 = vsel %vm315, %v305, 0
        %1094 = vmatprep.subr.mxu0 0.0
        %1095 = vmatpush1.xpose.msra.mxu0 %v1092
        %1096 = vmatprep.subr.mxu0 0.0
        %1097 = vmatpush1.xpose.msra.mxu0 0.0
        %1098 = vmatprep.subr.mxu0 0.0
        %1099 = vmatpush1.xpose.msra.mxu0 0.0
        %1100 = vmatprep.subr.mxu0 0.0
        %1101 = vmatpush1.xpose.msra.mxu0 0.0
        %1102 = vmatprep.subr.mxu0 0.0
        %1103 = vmatpush1.xpose.msra.mxu0 0.0
        %1104 = vmatprep.subr.mxu0 0.0
        %1105 = vmatpush1.xpose.msra.mxu0 0.0
        %1106 = vmatprep.subr.mxu0 0.0
        %1107 = vmatpush1.xpose.msra.mxu0 0.0
        %1108 = vmatprep.subr.mxu0 0.0
        %1109 = vmatpush1.xpose.msra.mxu0 0.0
        %1110 = vmatprep.subr.mxu0 0.0
        %1111 = vmatpush1.xpose.msra.mxu0 0.0
        %1112 = vmatprep.subr.mxu0 0.0
        %1113 = vmatpush1.xpose.msra.mxu0 0.0
        %1114 = vmatprep.subr.mxu0 0.0
        %1115 = vmatpush1.xpose.msra.mxu0 0.0
        %1116 = vmatprep.subr.mxu0 0.0
        %1117 = vmatpush1.xpose.msra.mxu0 0.0
        %1118 = vmatprep.subr.mxu0 0.0
        %1119 = vmatpush1.xpose.msra.mxu0 0.0
        %1120 = vmatprep.subr.mxu0 0.0
        %1121 = vmatpush1.xpose.msra.mxu0 0.0
        %1122 = vmatprep.subr.mxu0 0.0
        %1123 = vmatpush1.xpose.msra.mxu0 0.0
        %1124 = vmatprep.subr.mxu0 0.0
        %1125 = vmatpush1.xpose.msra.mxu0 0.0
        %1126 = vmatprep.subr.mxu0 0.0
        %1127 = vmatpush1.xpose.msra.mxu0 0.0
        %1128 = vmatprep.subr.mxu0 0.0
        %1129 = vmatpush1.xpose.msra.mxu0 0.0
        %1130 = vmatprep.subr.mxu0 0.0
        %1131 = vmatpush1.xpose.msra.mxu0 0.0
        %1132 = vmatprep.subr.mxu0 0.0
        %1133 = vmatpush1.xpose.msra.mxu0 0.0
        %1134 = vmatprep.subr.mxu0 0.0
        %1135 = vmatpush1.xpose.msra.mxu0 0.0
        %1136 = vmatprep.subr.mxu0 0.0
        %1137 = vmatpush1.xpose.msra.mxu0 0.0
        %1138 = vmatprep.subr.mxu0 0.0
        %1139 = vmatpush1.xpose.msra.mxu0 0.0
        %1140 = vmatprep.subr.mxu0 0.0
        %1141 = vmatpush1.xpose.msra.mxu0 0.0
        %1142 = vmatprep.subr.mxu0 0.0
        %1143 = vmatpush1.xpose.msra.mxu0 0.0
        %1144 = vmatprep.subr.mxu0 0.0
        %1145 = vmatpush1.xpose.msra.mxu0 0.0
        %1146 = vmatprep.subr.mxu0 0.0
        %1147 = vmatpush1.xpose.msra.mxu0 0.0
        %1148 = vmatprep.subr.mxu0 0.0
        %1149 = vmatpush1.xpose.msra.mxu0 0.0
        %1150 = vmatprep.subr.mxu0 0.0
        %1151 = vmatpush1.xpose.msra.mxu0 0.0
        %1152 = vmatprep.subr.mxu0 0.0
        %1153 = vmatpush1.xpose.msra.mxu0 0.0
        %1154 = vmatprep.subr.mxu0 0.0
        %1155 = vmatpush1.xpose.msra.mxu0 0.0
        %1156 = vmatprep.subr.mxu0 0.0
        %1157 = vmatpush1.xpose.msra.mxu0 0.0
        %1158 = vmatprep.mubr.f32.mxu0 0.0
        %1159 = vmatmul.mubr.f32.gmra.mrb[0].mxu0 %v317
        %v1160 = vpop.f32.mrb[0].mxu0
        %v1161 = vadd.f32 %v1090, %v1160
        %v1162 = vpop.f32.mrb[0].mxu0
        %1163 = vdwg.mxu0
        %v1165 = vsel %vm547, %v1009, 0
        %v1168 = vsel %vm547, %v1084, 0
        %1170 = vmatprep.subr.mxu0 0.0
        %1171 = vmatpush1.xpose.msra.mxu0 %v1168
        %1172 = vmatprep.subr.mxu0 0.0
        %1173 = vmatpush1.xpose.msra.mxu0 0.0
        %1174 = vmatprep.subr.mxu0 0.0
        %1175 = vmatpush1.xpose.msra.mxu0 0.0
        %1176 = vmatprep.subr.mxu0 0.0
        %1177 = vmatpush1.xpose.msra.mxu0 0.0
        %1178 = vmatprep.subr.mxu0 0.0
        %1179 = vmatpush1.xpose.msra.mxu0 0.0
        %1180 = vmatprep.subr.mxu0 0.0
        %1181 = vmatpush1.xpose.msra.mxu0 0.0
        %1182 = vmatprep.subr.mxu0 0.0
        %1183 = vmatpush1.xpose.msra.mxu0 0.0
        %1184 = vmatprep.subr.mxu0 0.0
        %1185 = vmatpush1.xpose.msra.mxu0 0.0
        %1186 = vmatprep.subr.mxu0 0.0
        %1187 = vmatpush1.xpose.msra.mxu0 0.0
        %1188 = vmatprep.subr.mxu0 0.0
        %1189 = vmatpush1.xpose.msra.mxu0 0.0
        %1190 = vmatprep.subr.mxu0 0.0
        %1191 = vmatpush1.xpose.msra.mxu0 0.0
        %1192 = vmatprep.subr.mxu0 0.0
        %1193 = vmatpush1.xpose.msra.mxu0 0.0
        %1194 = vmatprep.subr.mxu0 0.0
        %1195 = vmatpush1.xpose.msra.mxu0 0.0
        %1196 = vmatprep.subr.mxu0 0.0
        %1197 = vmatpush1.xpose.msra.mxu0 0.0
        %1198 = vmatprep.subr.mxu0 0.0
        %1199 = vmatpush1.xpose.msra.mxu0 0.0
        %1200 = vmatprep.subr.mxu0 0.0
        %1201 = vmatpush1.xpose.msra.mxu0 0.0
        %1202 = vmatprep.subr.mxu0 0.0
        %1203 = vmatpush1.xpose.msra.mxu0 0.0
        %1204 = vmatprep.subr.mxu0 0.0
        %1205 = vmatpush1.xpose.msra.mxu0 0.0
        %1206 = vmatprep.subr.mxu0 0.0
        %1207 = vmatpush1.xpose.msra.mxu0 0.0
        %1208 = vmatprep.subr.mxu0 0.0
        %1209 = vmatpush1.xpose.msra.mxu0 0.0
        %1210 = vmatprep.subr.mxu0 0.0
        %1211 = vmatpush1.xpose.msra.mxu0 0.0
        %1212 = vmatprep.subr.mxu0 0.0
        %1213 = vmatpush1.xpose.msra.mxu0 0.0
        %1214 = vmatprep.subr.mxu0 0.0
        %1215 = vmatpush1.xpose.msra.mxu0 0.0
        %1216 = vmatprep.subr.mxu0 0.0
        %1217 = vmatpush1.xpose.msra.mxu0 0.0
        %1218 = vmatprep.subr.mxu0 0.0
        %1219 = vmatpush1.xpose.msra.mxu0 0.0
        %1220 = vmatprep.subr.mxu0 0.0
        %1221 = vmatpush1.xpose.msra.mxu0 0.0
        %1222 = vmatprep.subr.mxu0 0.0
        %1223 = vmatpush1.xpose.msra.mxu0 0.0
        %1224 = vmatprep.subr.mxu0 0.0
        %1225 = vmatpush1.xpose.msra.mxu0 0.0
        %1226 = vmatprep.subr.mxu0 0.0
        %1227 = vmatpush1.xpose.msra.mxu0 0.0
        %1228 = vmatprep.subr.mxu0 0.0
        %1229 = vmatpush1.xpose.msra.mxu0 0.0
        %1230 = vmatprep.subr.mxu0 0.0
        %1231 = vmatpush1.xpose.msra.mxu0 0.0
        %1232 = vmatprep.subr.mxu0 0.0
        %1233 = vmatpush1.xpose.msra.mxu0 0.0
        %1234 = vmatprep.mubr.f32.mxu0 0.0
        %1235 = vmatmul.mubr.f32.gmra.mrb[0].mxu0 %v1165
        %v1236 = vpop.f32.mrb[0].mxu0
        %v1237 = vadd.f32 0.0, %v1236
        %v1238 = vpop.f32.mrb[0].mxu0
        %1239 = vdwg.mxu0
        %v1240 = vlaneseq
        %v1241 = vshrl.u32 %v1240, 7
        %v1242 = vsub.s32 3, %v1241
        %v1243 = vrot.slane %v292, %v1242
        %v1245 = vsel %vm315, %v298, 0
        %1247 = vmatprep.subr.mxu0 0.0
        %1248 = vmatpush1.xpose.msra.mxu0 %v1245
        %1249 = vmatprep.subr.mxu0 0.0
        %1250 = vmatpush1.xpose.msra.mxu0 0.0
        %1251 = vmatprep.subr.mxu0 0.0
        %1252 = vmatpush1.xpose.msra.mxu0 0.0
        %1253 = vmatprep.subr.mxu0 0.0
        %1254 = vmatpush1.xpose.msra.mxu0 0.0
        %1255 = vmatprep.subr.mxu0 0.0
        %1256 = vmatpush1.xpose.msra.mxu0 0.0
        %1257 = vmatprep.subr.mxu0 0.0
        %1258 = vmatpush1.xpose.msra.mxu0 0.0
        %1259 = vmatprep.subr.mxu0 0.0
        %1260 = vmatpush1.xpose.msra.mxu0 0.0
        %1261 = vmatprep.subr.mxu0 0.0
        %1262 = vmatpush1.xpose.msra.mxu0 0.0
        %1263 = vmatprep.subr.mxu0 0.0
        %1264 = vmatpush1.xpose.msra.mxu0 0.0
        %1265 = vmatprep.subr.mxu0 0.0
        %1266 = vmatpush1.xpose.msra.mxu0 0.0
        %1267 = vmatprep.subr.mxu0 0.0
        %1268 = vmatpush1.xpose.msra.mxu0 0.0
        %1269 = vmatprep.subr.mxu0 0.0
        %1270 = vmatpush1.xpose.msra.mxu0 0.0
        %1271 = vmatprep.subr.mxu0 0.0
        %1272 = vmatpush1.xpose.msra.mxu0 0.0
        %1273 = vmatprep.subr.mxu0 0.0
        %1274 = vmatpush1.xpose.msra.mxu0 0.0
        %1275 = vmatprep.subr.mxu0 0.0
        %1276 = vmatpush1.xpose.msra.mxu0 0.0
        %1277 = vmatprep.subr.mxu0 0.0
        %1278 = vmatpush1.xpose.msra.mxu0 0.0
        %1279 = vmatprep.subr.mxu0 0.0
        %1280 = vmatpush1.xpose.msra.mxu0 0.0
        %1281 = vmatprep.subr.mxu0 0.0
        %1282 = vmatpush1.xpose.msra.mxu0 0.0
        %1283 = vmatprep.subr.mxu0 0.0
        %1284 = vmatpush1.xpose.msra.mxu0 0.0
        %1285 = vmatprep.subr.mxu0 0.0
        %1286 = vmatpush1.xpose.msra.mxu0 0.0
        %1287 = vmatprep.subr.mxu0 0.0
        %1288 = vmatpush1.xpose.msra.mxu0 0.0
        %1289 = vmatprep.subr.mxu0 0.0
        %1290 = vmatpush1.xpose.msra.mxu0 0.0
        %1291 = vmatprep.subr.mxu0 0.0
        %1292 = vmatpush1.xpose.msra.mxu0 0.0
        %1293 = vmatprep.subr.mxu0 0.0
        %1294 = vmatpush1.xpose.msra.mxu0 0.0
        %1295 = vmatprep.subr.mxu0 0.0
        %1296 = vmatpush1.xpose.msra.mxu0 0.0
        %1297 = vmatprep.subr.mxu0 0.0
        %1298 = vmatpush1.xpose.msra.mxu0 0.0
        %1299 = vmatprep.subr.mxu0 0.0
        %1300 = vmatpush1.xpose.msra.mxu0 0.0
        %1301 = vmatprep.subr.mxu0 0.0
        %1302 = vmatpush1.xpose.msra.mxu0 0.0
        %1303 = vmatprep.subr.mxu0 0.0
        %1304 = vmatpush1.xpose.msra.mxu0 0.0
        %1305 = vmatprep.subr.mxu0 0.0
        %1306 = vmatpush1.xpose.msra.mxu0 0.0
        %1307 = vmatprep.subr.mxu0 0.0
        %1308 = vmatpush1.xpose.msra.mxu0 0.0
        %1309 = vmatprep.subr.mxu0 0.0
        %1310 = vmatpush1.xpose.msra.mxu0 0.0
        %1311 = vmatprep.mubr.f32.mxu0 0.0
        %1312 = vmatmul.mubr.f32.gmra.mrb[0].mxu0 %v317
        %v1313 = vpop.f32.mrb[0].mxu0
        %v1314 = vadd.f32 %v1243, %v1313
        %v1315 = vpop.f32.mrb[0].mxu0
        %1316 = vdwg.mxu0
        %v1317 = vmul.f32 %v1314, 0.35355338
        %v1318 = vlaneseq
        %v1319 = vshrl.u32 %v1318, 7
        %v1320 = vsub.s32 7, %v1319
        %v1321 = vrot.slane %v292, %v1320
        %v1323 = vsel %vm315, %v302, 0
        %1325 = vmatprep.subr.mxu0 0.0
        %1326 = vmatpush1.xpose.msra.mxu0 %v1323
        %1327 = vmatprep.subr.mxu0 0.0
        %1328 = vmatpush1.xpose.msra.mxu0 0.0
        %1329 = vmatprep.subr.mxu0 0.0
        %1330 = vmatpush1.xpose.msra.mxu0 0.0
        %1331 = vmatprep.subr.mxu0 0.0
        %1332 = vmatpush1.xpose.msra.mxu0 0.0
        %1333 = vmatprep.subr.mxu0 0.0
        %1334 = vmatpush1.xpose.msra.mxu0 0.0
        %1335 = vmatprep.subr.mxu0 0.0
        %1336 = vmatpush1.xpose.msra.mxu0 0.0
        %1337 = vmatprep.subr.mxu0 0.0
        %1338 = vmatpush1.xpose.msra.mxu0 0.0
        %1339 = vmatprep.subr.mxu0 0.0
        %1340 = vmatpush1.xpose.msra.mxu0 0.0
        %1341 = vmatprep.subr.mxu0 0.0
        %1342 = vmatpush1.xpose.msra.mxu0 0.0
        %1343 = vmatprep.subr.mxu0 0.0
        %1344 = vmatpush1.xpose.msra.mxu0 0.0
        %1345 = vmatprep.subr.mxu0 0.0
        %1346 = vmatpush1.xpose.msra.mxu0 0.0
        %1347 = vmatprep.subr.mxu0 0.0
        %1348 = vmatpush1.xpose.msra.mxu0 0.0
        %1349 = vmatprep.subr.mxu0 0.0
        %1350 = vmatpush1.xpose.msra.mxu0 0.0
        %1351 = vmatprep.subr.mxu0 0.0
        %1352 = vmatpush1.xpose.msra.mxu0 0.0
        %1353 = vmatprep.subr.mxu0 0.0
        %1354 = vmatpush1.xpose.msra.mxu0 0.0
        %1355 = vmatprep.subr.mxu0 0.0
        %1356 = vmatpush1.xpose.msra.mxu0 0.0
        %1357 = vmatprep.subr.mxu0 0.0
        %1358 = vmatpush1.xpose.msra.mxu0 0.0
        %1359 = vmatprep.subr.mxu0 0.0
        %1360 = vmatpush1.xpose.msra.mxu0 0.0
        %1361 = vmatprep.subr.mxu0 0.0
        %1362 = vmatpush1.xpose.msra.mxu0 0.0
        %1363 = vmatprep.subr.mxu0 0.0
        %1364 = vmatpush1.xpose.msra.mxu0 0.0
        %1365 = vmatprep.subr.mxu0 0.0
        %1366 = vmatpush1.xpose.msra.mxu0 0.0
        %1367 = vmatprep.subr.mxu0 0.0
        %1368 = vmatpush1.xpose.msra.mxu0 0.0
        %1369 = vmatprep.subr.mxu0 0.0
        %1370 = vmatpush1.xpose.msra.mxu0 0.0
        %1371 = vmatprep.subr.mxu0 0.0
        %1372 = vmatpush1.xpose.msra.mxu0 0.0
        %1373 = vmatprep.subr.mxu0 0.0
        %1374 = vmatpush1.xpose.msra.mxu0 0.0
        %1375 = vmatprep.subr.mxu0 0.0
        %1376 = vmatpush1.xpose.msra.mxu0 0.0
        %1377 = vmatprep.subr.mxu0 0.0
        %1378 = vmatpush1.xpose.msra.mxu0 0.0
        %1379 = vmatprep.subr.mxu0 0.0
        %1380 = vmatpush1.xpose.msra.mxu0 0.0
        %1381 = vmatprep.subr.mxu0 0.0
        %1382 = vmatpush1.xpose.msra.mxu0 0.0
        %1383 = vmatprep.subr.mxu0 0.0
        %1384 = vmatpush1.xpose.msra.mxu0 0.0
        %1385 = vmatprep.subr.mxu0 0.0
        %1386 = vmatpush1.xpose.msra.mxu0 0.0
        %1387 = vmatprep.subr.mxu0 0.0
        %1388 = vmatpush1.xpose.msra.mxu0 0.0
        %1389 = vmatprep.mubr.f32.mxu0 0.0
        %1390 = vmatmul.mubr.f32.gmra.mrb[0].mxu0 %v317
        %v1391 = vpop.f32.mrb[0].mxu0
        %v1392 = vadd.f32 %v1321, %v1391
        %v1393 = vpop.f32.mrb[0].mxu0
        %1394 = vdwg.mxu0
        %v1395 = vlaneseq
        %v1396 = vshrl.u32 %v1395, 7
        %v1397 = vsub.s32 3, %v1396
        %v1398 = vrot.slane %v293, %v1397
        %v1400 = vsel %vm315, %v306, 0
        %1402 = vmatprep.subr.mxu0 0.0
        %1403 = vmatpush1.xpose.msra.mxu0 %v1400
        %1404 = vmatprep.subr.mxu0 0.0
        %1405 = vmatpush1.xpose.msra.mxu0 0.0
        %1406 = vmatprep.subr.mxu0 0.0
        %1407 = vmatpush1.xpose.msra.mxu0 0.0
        %1408 = vmatprep.subr.mxu0 0.0
        %1409 = vmatpush1.xpose.msra.mxu0 0.0
        %1410 = vmatprep.subr.mxu0 0.0
        %1411 = vmatpush1.xpose.msra.mxu0 0.0
        %1412 = vmatprep.subr.mxu0 0.0
        %1413 = vmatpush1.xpose.msra.mxu0 0.0
        %1414 = vmatprep.subr.mxu0 0.0
        %1415 = vmatpush1.xpose.msra.mxu0 0.0
        %1416 = vmatprep.subr.mxu0 0.0
        %1417 = vmatpush1.xpose.msra.mxu0 0.0
        %1418 = vmatprep.subr.mxu0 0.0
        %1419 = vmatpush1.xpose.msra.mxu0 0.0
        %1420 = vmatprep.subr.mxu0 0.0
        %1421 = vmatpush1.xpose.msra.mxu0 0.0
        %1422 = vmatprep.subr.mxu0 0.0
        %1423 = vmatpush1.xpose.msra.mxu0 0.0
        %1424 = vmatprep.subr.mxu0 0.0
        %1425 = vmatpush1.xpose.msra.mxu0 0.0
        %1426 = vmatprep.subr.mxu0 0.0
        %1427 = vmatpush1.xpose.msra.mxu0 0.0
        %1428 = vmatprep.subr.mxu0 0.0
        %1429 = vmatpush1.xpose.msra.mxu0 0.0
        %1430 = vmatprep.subr.mxu0 0.0
        %1431 = vmatpush1.xpose.msra.mxu0 0.0
        %1432 = vmatprep.subr.mxu0 0.0
        %1433 = vmatpush1.xpose.msra.mxu0 0.0
        %1434 = vmatprep.subr.mxu0 0.0
        %1435 = vmatpush1.xpose.msra.mxu0 0.0
        %1436 = vmatprep.subr.mxu0 0.0
        %1437 = vmatpush1.xpose.msra.mxu0 0.0
        %1438 = vmatprep.subr.mxu0 0.0
        %1439 = vmatpush1.xpose.msra.mxu0 0.0
        %1440 = vmatprep.subr.mxu0 0.0
        %1441 = vmatpush1.xpose.msra.mxu0 0.0
        %1442 = vmatprep.subr.mxu0 0.0
        %1443 = vmatpush1.xpose.msra.mxu0 0.0
        %1444 = vmatprep.subr.mxu0 0.0
        %1445 = vmatpush1.xpose.msra.mxu0 0.0
        %1446 = vmatprep.subr.mxu0 0.0
        %1447 = vmatpush1.xpose.msra.mxu0 0.0
        %1448 = vmatprep.subr.mxu0 0.0
        %1449 = vmatpush1.xpose.msra.mxu0 0.0
        %1450 = vmatprep.subr.mxu0 0.0
        %1451 = vmatpush1.xpose.msra.mxu0 0.0
        %1452 = vmatprep.subr.mxu0 0.0
        %1453 = vmatpush1.xpose.msra.mxu0 0.0
        %1454 = vmatprep.subr.mxu0 0.0
        %1455 = vmatpush1.xpose.msra.mxu0 0.0
        %1456 = vmatprep.subr.mxu0 0.0
        %1457 = vmatpush1.xpose.msra.mxu0 0.0
        %1458 = vmatprep.subr.mxu0 0.0
        %1459 = vmatpush1.xpose.msra.mxu0 0.0
        %1460 = vmatprep.subr.mxu0 0.0
        %1461 = vmatpush1.xpose.msra.mxu0 0.0
        %1462 = vmatprep.subr.mxu0 0.0
        %1463 = vmatpush1.xpose.msra.mxu0 0.0
        %1464 = vmatprep.subr.mxu0 0.0
        %1465 = vmatpush1.xpose.msra.mxu0 0.0
        %1466 = vmatprep.mubr.f32.mxu0 0.0
        %1467 = vmatmul.mubr.f32.gmra.mrb[0].mxu0 %v317
        %v1468 = vpop.f32.mrb[0].mxu0
        %v1469 = vadd.f32 %v1398, %v1468
        %v1470 = vpop.f32.mrb[0].mxu0
        %1471 = vdwg.mxu0
        %v1473 = vsel %vm547, %v1317, 0
        %v1476 = vsel %vm547, %v1392, 0
        %1478 = vmatprep.subr.mxu0 0.0
        %1479 = vmatpush1.xpose.msra.mxu0 %v1476
        %1480 = vmatprep.subr.mxu0 0.0
        %1481 = vmatpush1.xpose.msra.mxu0 0.0
        %1482 = vmatprep.subr.mxu0 0.0
        %1483 = vmatpush1.xpose.msra.mxu0 0.0
        %1484 = vmatprep.subr.mxu0 0.0
        %1485 = vmatpush1.xpose.msra.mxu0 0.0
        %1486 = vmatprep.subr.mxu0 0.0
        %1487 = vmatpush1.xpose.msra.mxu0 0.0
        %1488 = vmatprep.subr.mxu0 0.0
        %1489 = vmatpush1.xpose.msra.mxu0 0.0
        %1490 = vmatprep.subr.mxu0 0.0
        %1491 = vmatpush1.xpose.msra.mxu0 0.0
        %1492 = vmatprep.subr.mxu0 0.0
        %1493 = vmatpush1.xpose.msra.mxu0 0.0
        %1494 = vmatprep.subr.mxu0 0.0
        %1495 = vmatpush1.xpose.msra.mxu0 0.0
        %1496 = vmatprep.subr.mxu0 0.0
        %1497 = vmatpush1.xpose.msra.mxu0 0.0
        %1498 = vmatprep.subr.mxu0 0.0
        %1499 = vmatpush1.xpose.msra.mxu0 0.0
        %1500 = vmatprep.subr.mxu0 0.0
        %1501 = vmatpush1.xpose.msra.mxu0 0.0
        %1502 = vmatprep.subr.mxu0 0.0
        %1503 = vmatpush1.xpose.msra.mxu0 0.0
        %1504 = vmatprep.subr.mxu0 0.0
        %1505 = vmatpush1.xpose.msra.mxu0 0.0
        %1506 = vmatprep.subr.mxu0 0.0
        %1507 = vmatpush1.xpose.msra.mxu0 0.0
        %1508 = vmatprep.subr.mxu0 0.0
        %1509 = vmatpush1.xpose.msra.mxu0 0.0
        %1510 = vmatprep.subr.mxu0 0.0
        %1511 = vmatpush1.xpose.msra.mxu0 0.0
        %1512 = vmatprep.subr.mxu0 0.0
        %1513 = vmatpush1.xpose.msra.mxu0 0.0
        %1514 = vmatprep.subr.mxu0 0.0
        %1515 = vmatpush1.xpose.msra.mxu0 0.0
        %1516 = vmatprep.subr.mxu0 0.0
        %1517 = vmatpush1.xpose.msra.mxu0 0.0
        %1518 = vmatprep.subr.mxu0 0.0
        %1519 = vmatpush1.xpose.msra.mxu0 0.0
        %1520 = vmatprep.subr.mxu0 0.0
        %1521 = vmatpush1.xpose.msra.mxu0 0.0
        %1522 = vmatprep.subr.mxu0 0.0
        %1523 = vmatpush1.xpose.msra.mxu0 0.0
        %1524 = vmatprep.subr.mxu0 0.0
        %1525 = vmatpush1.xpose.msra.mxu0 0.0
        %1526 = vmatprep.subr.mxu0 0.0
        %1527 = vmatpush1.xpose.msra.mxu0 0.0
        %1528 = vmatprep.subr.mxu0 0.0
        %1529 = vmatpush1.xpose.msra.mxu0 0.0
        %1530 = vmatprep.subr.mxu0 0.0
        %1531 = vmatpush1.xpose.msra.mxu0 0.0
        %1532 = vmatprep.subr.mxu0 0.0
        %1533 = vmatpush1.xpose.msra.mxu0 0.0
        %1534 = vmatprep.subr.mxu0 0.0
        %1535 = vmatpush1.xpose.msra.mxu0 0.0
        %1536 = vmatprep.subr.mxu0 0.0
        %1537 = vmatpush1.xpose.msra.mxu0 0.0
        %1538 = vmatprep.subr.mxu0 0.0
        %1539 = vmatpush1.xpose.msra.mxu0 0.0
        %1540 = vmatprep.subr.mxu0 0.0
        %1541 = vmatpush1.xpose.msra.mxu0 0.0
        %1542 = vmatprep.mubr.f32.mxu0 0.0
        %1543 = vmatmul.mubr.f32.gmra.mrb[0].mxu0 %v1473
        %v1544 = vpop.f32.mrb[0].mxu0
        %v1545 = vadd.f32 0.0, %v1544
        %v1546 = vpop.f32.mrb[0].mxu0
        %1547 = vdwg.mxu0
        %v1549 = vlaneseq
        %v1550 = vshrl.u32 %v1549, 7
        %v1551 = vsub.s32 0, %v1550
        %v1552 = vrot.slane %v291, %v1551
        %v1554 = vadd.f32 %v621, %v1552
        %v1555 = vadd.f32 %v929, %v1552
        %v1556 = vadd.f32 %v1237, %v1552
        %v1557 = vadd.f32 %v1545, %v1552
        %v1558 = vsel %vm547, %v1554, -inf
        %1559 = vmax.xlane.f32.xlu0 %v1558
        %v1560 = vpop.xlane.xlu0 %1559
        %v1561 = vsel %vm547, %v1555, -inf
        %1562 = vmax.xlane.f32.xlu0 %v1561
        %v1563 = vpop.xlane.xlu0 %1562
        %v1564 = vsel %vm547, %v1556, -inf
        %1565 = vmax.xlane.f32.xlu0 %v1564
        %v1566 = vpop.xlane.xlu0 %1565
        %v1567 = vsel %vm547, %v1557, -inf
        %1568 = vmax.xlane.f32.xlu0 %v1567
        %v1569 = vpop.xlane.xlu0 %1568
        %v1570 = vsub.f32 %v1554, %v1560
        %v1571 = vsub.f32 %v1555, %v1563
        %v1572 = vsub.f32 %v1556, %v1566
        %v1573 = vsub.f32 %v1557, %v1569
        %v1574 = vmul.f32 %v1570, 1.442695
        %v1575 = vpow.pop %v1574
        %v1576 = vmul.f32 %v1571, 1.442695
        %v1577 = vpow.pop %v1576
        %v1578 = vmul.f32 %v1572, 1.442695
        %v1579 = vpow.pop %v1578
        %v1580 = vmul.f32 %v1573, 1.442695
        %v1581 = vpow.pop %v1580
        %v1582 = vsel %vm547, %v1575, 0.0
        %1583 = vadd.xlane.f32.xlu0 %v1582
        %v1584 = vpop.xlane.xlu0 %1583
        %v1585 = vsel %vm547, %v1577, 0.0
        %1586 = vadd.xlane.f32.xlu0 %v1585
        %v1587 = vpop.xlane.xlu0 %1586
        %v1588 = vsel %vm547, %v1579, 0.0
        %1589 = vadd.xlane.f32.xlu0 %v1588
        %v1590 = vpop.xlane.xlu0 %1589
        %v1591 = vsel %vm547, %v1581, 0.0
        %1592 = vadd.xlane.f32.xlu0 %v1591
        %v1593 = vpop.xlane.xlu0 %1592
        %v1594 = vrcp.pop %v1584
        %v1595 = vrcp.pop %v1587
        %v1596 = vrcp.pop %v1590
        %v1597 = vrcp.pop %v1593
        %v1598 = vmul.f32 %v1575, %v1594
        %v1599 = vmul.f32 %v1577, %v1595
        %v1600 = vmul.f32 %v1579, %v1596
        %v1601 = vmul.f32 %v1581, %v1597
        %v1603 = vsel %vm547, %v1598, 0
        %1605 = vmatprep.subr.mxu0 0.0
        %1606 = vmatpush1.msra.mxu0 %v544
        %1607 = vmatprep.subr.mxu0 0.0
        %1608 = vmatpush1.msra.mxu0 0.0
        %1609 = vmatprep.subr.mxu0 0.0
        %1610 = vmatpush1.msra.mxu0 0.0
        %1611 = vmatprep.subr.mxu0 0.0
        %1612 = vmatpush1.msra.mxu0 0.0
        %1613 = vmatprep.subr.mxu0 0.0
        %1614 = vmatpush1.msra.mxu0 0.0
        %1615 = vmatprep.subr.mxu0 0.0
        %1616 = vmatpush1.msra.mxu0 0.0
        %1617 = vmatprep.subr.mxu0 0.0
        %1618 = vmatpush1.msra.mxu0 0.0
        %1619 = vmatprep.subr.mxu0 0.0
        %1620 = vmatpush1.msra.mxu0 0.0
        %1621 = vmatprep.subr.mxu0 0.0
        %1622 = vmatpush1.msra.mxu0 0.0
        %1623 = vmatprep.subr.mxu0 0.0
        %1624 = vmatpush1.msra.mxu0 0.0
        %1625 = vmatprep.subr.mxu0 0.0
        %1626 = vmatpush1.msra.mxu0 0.0
        %1627 = vmatprep.subr.mxu0 0.0
        %1628 = vmatpush1.msra.mxu0 0.0
        %1629 = vmatprep.subr.mxu0 0.0
        %1630 = vmatpush1.msra.mxu0 0.0
        %1631 = vmatprep.subr.mxu0 0.0
        %1632 = vmatpush1.msra.mxu0 0.0
        %1633 = vmatprep.subr.mxu0 0.0
        %1634 = vmatpush1.msra.mxu0 0.0
        %1635 = vmatprep.subr.mxu0 0.0
        %1636 = vmatpush1.msra.mxu0 0.0
        %1637 = vmatprep.subr.mxu0 0.0
        %1638 = vmatpush1.msra.mxu0 0.0
        %1639 = vmatprep.subr.mxu0 0.0
        %1640 = vmatpush1.msra.mxu0 0.0
        %1641 = vmatprep.subr.mxu0 0.0
        %1642 = vmatpush1.msra.mxu0 0.0
        %1643 = vmatprep.subr.mxu0 0.0
        %1644 = vmatpush1.msra.mxu0 0.0
        %1645 = vmatprep.subr.mxu0 0.0
        %1646 = vmatpush1.msra.mxu0 0.0
        %1647 = vmatprep.subr.mxu0 0.0
        %1648 = vmatpush1.msra.mxu0 0.0
        %1649 = vmatprep.subr.mxu0 0.0
        %1650 = vmatpush1.msra.mxu0 0.0
        %1651 = vmatprep.subr.mxu0 0.0
        %1652 = vmatpush1.msra.mxu0 0.0
        %1653 = vmatprep.subr.mxu0 0.0
        %1654 = vmatpush1.msra.mxu0 0.0
        %1655 = vmatprep.subr.mxu0 0.0
        %1656 = vmatpush1.msra.mxu0 0.0
        %1657 = vmatprep.subr.mxu0 0.0
        %1658 = vmatpush1.msra.mxu0 0.0
        %1659 = vmatprep.subr.mxu0 0.0
        %1660 = vmatpush1.msra.mxu0 0.0
        %1661 = vmatprep.subr.mxu0 0.0
        %1662 = vmatpush1.msra.mxu0 0.0
        %1663 = vmatprep.subr.mxu0 0.0
        %1664 = vmatpush1.msra.mxu0 0.0
        %1665 = vmatprep.subr.mxu0 0.0
        %1666 = vmatpush1.msra.mxu0 0.0
        %1667 = vmatprep.subr.mxu0 0.0
        %1668 = vmatpush1.msra.mxu0 0.0
        %1669 = vmatprep.mubr.f32.mxu0 0.0
        %1670 = vmatmul.mubr.f32.gmra.mrb[0].mxu0 %v1603
        %v1671 = vpop.f32.mrb[0].mxu0
        %v1672 = vadd.f32 0.0, %v1671
        %v1673 = vpop.f32.mrb[0].mxu0
        %1674 = vdwg.mxu0
        %v1676 = vsel %vm547, %v1599, 0
        %1678 = vmatprep.subr.mxu0 0.0
        %1679 = vmatpush1.msra.mxu0 %v853
        %1680 = vmatprep.subr.mxu0 0.0
        %1681 = vmatpush1.msra.mxu0 0.0
        %1682 = vmatprep.subr.mxu0 0.0
        %1683 = vmatpush1.msra.mxu0 0.0
        %1684 = vmatprep.subr.mxu0 0.0
        %1685 = vmatpush1.msra.mxu0 0.0
        %1686 = vmatprep.subr.mxu0 0.0
        %1687 = vmatpush1.msra.mxu0 0.0
        %1688 = vmatprep.subr.mxu0 0.0
        %1689 = vmatpush1.msra.mxu0 0.0
        %1690 = vmatprep.subr.mxu0 0.0
        %1691 = vmatpush1.msra.mxu0 0.0
        %1692 = vmatprep.subr.mxu0 0.0
        %1693 = vmatpush1.msra.mxu0 0.0
        %1694 = vmatprep.subr.mxu0 0.0
        %1695 = vmatpush1.msra.mxu0 0.0
        %1696 = vmatprep.subr.mxu0 0.0
        %1697 = vmatpush1.msra.mxu0 0.0
        %1698 = vmatprep.subr.mxu0 0.0
        %1699 = vmatpush1.msra.mxu0 0.0
        %1700 = vmatprep.subr.mxu0 0.0
        %1701 = vmatpush1.msra.mxu0 0.0
        %1702 = vmatprep.subr.mxu0 0.0
        %1703 = vmatpush1.msra.mxu0 0.0
        %1704 = vmatprep.subr.mxu0 0.0
        %1705 = vmatpush1.msra.mxu0 0.0
        %1706 = vmatprep.subr.mxu0 0.0
        %1707 = vmatpush1.msra.mxu0 0.0
        %1708 = vmatprep.subr.mxu0 0.0
        %1709 = vmatpush1.msra.mxu0 0.0
        %1710 = vmatprep.subr.mxu0 0.0
        %1711 = vmatpush1.msra.mxu0 0.0
        %1712 = vmatprep.subr.mxu0 0.0
        %1713 = vmatpush1.msra.mxu0 0.0
        %1714 = vmatprep.subr.mxu0 0.0
        %1715 = vmatpush1.msra.mxu0 0.0
        %1716 = vmatprep.subr.mxu0 0.0
        %1717 = vmatpush1.msra.mxu0 0.0
        %1718 = vmatprep.subr.mxu0 0.0
        %1719 = vmatpush1.msra.mxu0 0.0
        %1720 = vmatprep.subr.mxu0 0.0
        %1721 = vmatpush1.msra.mxu0 0.0
        %1722 = vmatprep.subr.mxu0 0.0
        %1723 = vmatpush1.msra.mxu0 0.0
        %1724 = vmatprep.subr.mxu0 0.0
        %1725 = vmatpush1.msra.mxu0 0.0
        %1726 = vmatprep.subr.mxu0 0.0
        %1727 = vmatpush1.msra.mxu0 0.0
        %1728 = vmatprep.subr.mxu0 0.0
        %1729 = vmatpush1.msra.mxu0 0.0
        %1730 = vmatprep.subr.mxu0 0.0
        %1731 = vmatpush1.msra.mxu0 0.0
        %1732 = vmatprep.subr.mxu0 0.0
        %1733 = vmatpush1.msra.mxu0 0.0
        %1734 = vmatprep.subr.mxu0 0.0
        %1735 = vmatpush1.msra.mxu0 0.0
        %1736 = vmatprep.subr.mxu0 0.0
        %1737 = vmatpush1.msra.mxu0 0.0
        %1738 = vmatprep.subr.mxu0 0.0
        %1739 = vmatpush1.msra.mxu0 0.0
        %1740 = vmatprep.subr.mxu0 0.0
        %1741 = vmatpush1.msra.mxu0 0.0
        %1742 = vmatprep.mubr.f32.mxu0 0.0
        %1743 = vmatmul.mubr.f32.gmra.mrb[0].mxu0 %v1676
        %v1744 = vpop.f32.mrb[0].mxu0
        %v1745 = vadd.f32 0.0, %v1744
        %v1746 = vpop.f32.mrb[0].mxu0
        %1747 = vdwg.mxu0
        %v1749 = vsel %vm547, %v1745, 0
        %1751 = vmatprep.subr.mxu0 0.0
        %1752 = vmatpush1.msra.mxu0 %v308
        %1753 = vmatprep.subr.mxu0 0.0
        %1754 = vmatpush1.msra.mxu0 0.0
        %1755 = vmatprep.subr.mxu0 0.0
        %1756 = vmatpush1.msra.mxu0 0.0
        %1757 = vmatprep.subr.mxu0 0.0
        %1758 = vmatpush1.msra.mxu0 0.0
        %1759 = vmatprep.subr.mxu0 0.0
        %1760 = vmatpush1.msra.mxu0 0.0
        %1761 = vmatprep.subr.mxu0 0.0
        %1762 = vmatpush1.msra.mxu0 0.0
        %1763 = vmatprep.subr.mxu0 0.0
        %1764 = vmatpush1.msra.mxu0 0.0
        %1765 = vmatprep.subr.mxu0 0.0
        %1766 = vmatpush1.msra.mxu0 0.0
        %1767 = vmatprep.subr.mxu0 0.0
        %1768 = vmatpush1.msra.mxu0 0.0
        %1769 = vmatprep.subr.mxu0 0.0
        %1770 = vmatpush1.msra.mxu0 0.0
        %1771 = vmatprep.subr.mxu0 0.0
        %1772 = vmatpush1.msra.mxu0 0.0
        %1773 = vmatprep.subr.mxu0 0.0
        %1774 = vmatpush1.msra.mxu0 0.0
        %1775 = vmatprep.subr.mxu0 0.0
        %1776 = vmatpush1.msra.mxu0 0.0
        %1777 = vmatprep.subr.mxu0 0.0
        %1778 = vmatpush1.msra.mxu0 0.0
        %1779 = vmatprep.subr.mxu0 0.0
        %1780 = vmatpush1.msra.mxu0 0.0
        %1781 = vmatprep.subr.mxu0 0.0
        %1782 = vmatpush1.msra.mxu0 0.0
        %1783 = vmatprep.subr.mxu0 0.0
        %1784 = vmatpush1.msra.mxu0 0.0
        %1785 = vmatprep.subr.mxu0 0.0
        %1786 = vmatpush1.msra.mxu0 0.0
        %1787 = vmatprep.subr.mxu0 0.0
        %1788 = vmatpush1.msra.mxu0 0.0
        %1789 = vmatprep.subr.mxu0 0.0
        %1790 = vmatpush1.msra.mxu0 0.0
        %1791 = vmatprep.subr.mxu0 0.0
        %1792 = vmatpush1.msra.mxu0 0.0
        %1793 = vmatprep.subr.mxu0 0.0
        %1794 = vmatpush1.msra.mxu0 0.0
        %1795 = vmatprep.subr.mxu0 0.0
        %1796 = vmatpush1.msra.mxu0 0.0
        %1797 = vmatprep.subr.mxu0 0.0
        %1798 = vmatpush1.msra.mxu0 0.0
        %1799 = vmatprep.subr.mxu0 0.0
        %1800 = vmatpush1.msra.mxu0 0.0
        %1801 = vmatprep.subr.mxu0 0.0
        %1802 = vmatpush1.msra.mxu0 0.0
        %1803 = vmatprep.subr.mxu0 0.0
        %1804 = vmatpush1.msra.mxu0 0.0
        %1805 = vmatprep.subr.mxu0 0.0
        %1806 = vmatpush1.msra.mxu0 0.0
        %1807 = vmatprep.subr.mxu0 0.0
        %1808 = vmatpush1.msra.mxu0 0.0
        %1809 = vmatprep.subr.mxu0 0.0
        %1810 = vmatpush1.msra.mxu0 0.0
        %1811 = vmatprep.subr.mxu0 0.0
        %1812 = vmatpush1.msra.mxu0 0.0
        %1813 = vmatprep.subr.mxu0 0.0
        %1814 = vmatpush1.msra.mxu0 0.0
        %1815 = vmatprep.mubr.f32.mxu0 0.0
        %1816 = vmatmul.mubr.f32.gmra.mrb[0].mxu0 %v1749
        %v1817 = vpop.f32.mrb[0].mxu0
        %v1818 = vadd.f32 0.0, %v1817
        %v1819 = vpop.f32.mrb[0].mxu0
        %1820 = vdwg.mxu0
        %v1822 = vsel %vm547, %v1672, 0
        %1824 = vmatprep.subr.mxu0 0.0
        %1825 = vmatpush1.msra.mxu0 %v307
        %1826 = vmatprep.subr.mxu0 0.0
        %1827 = vmatpush1.msra.mxu0 0.0
        %1828 = vmatprep.subr.mxu0 0.0
        %1829 = vmatpush1.msra.mxu0 0.0
        %1830 = vmatprep.subr.mxu0 0.0
        %1831 = vmatpush1.msra.mxu0 0.0
        %1832 = vmatprep.subr.mxu0 0.0
        %1833 = vmatpush1.msra.mxu0 0.0
        %1834 = vmatprep.subr.mxu0 0.0
        %1835 = vmatpush1.msra.mxu0 0.0
        %1836 = vmatprep.subr.mxu0 0.0
        %1837 = vmatpush1.msra.mxu0 0.0
        %1838 = vmatprep.subr.mxu0 0.0
        %1839 = vmatpush1.msra.mxu0 0.0
        %1840 = vmatprep.subr.mxu0 0.0
        %1841 = vmatpush1.msra.mxu0 0.0
        %1842 = vmatprep.subr.mxu0 0.0
        %1843 = vmatpush1.msra.mxu0 0.0
        %1844 = vmatprep.subr.mxu0 0.0
        %1845 = vmatpush1.msra.mxu0 0.0
        %1846 = vmatprep.subr.mxu0 0.0
        %1847 = vmatpush1.msra.mxu0 0.0
        %1848 = vmatprep.subr.mxu0 0.0
        %1849 = vmatpush1.msra.mxu0 0.0
        %1850 = vmatprep.subr.mxu0 0.0
        %1851 = vmatpush1.msra.mxu0 0.0
        %1852 = vmatprep.subr.mxu0 0.0
        %1853 = vmatpush1.msra.mxu0 0.0
        %1854 = vmatprep.subr.mxu0 0.0
        %1855 = vmatpush1.msra.mxu0 0.0
        %1856 = vmatprep.subr.mxu0 0.0
        %1857 = vmatpush1.msra.mxu0 0.0
        %1858 = vmatprep.subr.mxu0 0.0
        %1859 = vmatpush1.msra.mxu0 0.0
        %1860 = vmatprep.subr.mxu0 0.0
        %1861 = vmatpush1.msra.mxu0 0.0
        %1862 = vmatprep.subr.mxu0 0.0
        %1863 = vmatpush1.msra.mxu0 0.0
        %1864 = vmatprep.subr.mxu0 0.0
        %1865 = vmatpush1.msra.mxu0 0.0
        %1866 = vmatprep.subr.mxu0 0.0
        %1867 = vmatpush1.msra.mxu0 0.0
        %1868 = vmatprep.subr.mxu0 0.0
        %1869 = vmatpush1.msra.mxu0 0.0
        %1870 = vmatprep.subr.mxu0 0.0
        %1871 = vmatpush1.msra.mxu0 0.0
        %1872 = vmatprep.subr.mxu0 0.0
        %1873 = vmatpush1.msra.mxu0 0.0
        %1874 = vmatprep.subr.mxu0 0.0
        %1875 = vmatpush1.msra.mxu0 0.0
        %1876 = vmatprep.subr.mxu0 0.0
        %1877 = vmatpush1.msra.mxu0 0.0
        %1878 = vmatprep.subr.mxu0 0.0
        %1879 = vmatpush1.msra.mxu0 0.0
        %1880 = vmatprep.subr.mxu0 0.0
        %1881 = vmatpush1.msra.mxu0 0.0
        %1882 = vmatprep.subr.mxu0 0.0
        %1883 = vmatpush1.msra.mxu0 0.0
        %1884 = vmatprep.subr.mxu0 0.0
        %1885 = vmatpush1.msra.mxu0 0.0
        %1886 = vmatprep.subr.mxu0 0.0
        %1887 = vmatpush1.msra.mxu0 0.0
        %1888 = vmatprep.mubr.f32.mxu0 0.0
        %1889 = vmatmul.mubr.f32.gmra.mrb[0].mxu0 %v1822
        %v1890 = vpop.f32.mrb[0].mxu0
        %v1891 = vadd.f32 %v1818, %v1890
        %v1892 = vpop.f32.mrb[0].mxu0
        %1893 = vdwg.mxu0
        %v1895 = vsel %vm547, %v1600, 0
        %1897 = vmatprep.subr.mxu0 0.0
        %1898 = vmatpush1.msra.mxu0 %v1161
        %1899 = vmatprep.subr.mxu0 0.0
        %1900 = vmatpush1.msra.mxu0 0.0
        %1901 = vmatprep.subr.mxu0 0.0
        %1902 = vmatpush1.msra.mxu0 0.0
        %1903 = vmatprep.subr.mxu0 0.0
        %1904 = vmatpush1.msra.mxu0 0.0
        %1905 = vmatprep.subr.mxu0 0.0
        %1906 = vmatpush1.msra.mxu0 0.0
        %1907 = vmatprep.subr.mxu0 0.0
        %1908 = vmatpush1.msra.mxu0 0.0
        %1909 = vmatprep.subr.mxu0 0.0
        %1910 = vmatpush1.msra.mxu0 0.0
        %1911 = vmatprep.subr.mxu0 0.0
        %1912 = vmatpush1.msra.mxu0 0.0
        %1913 = vmatprep.subr.mxu0 0.0
        %1914 = vmatpush1.msra.mxu0 0.0
        %1915 = vmatprep.subr.mxu0 0.0
        %1916 = vmatpush1.msra.mxu0 0.0
        %1917 = vmatprep.subr.mxu0 0.0
        %1918 = vmatpush1.msra.mxu0 0.0
        %1919 = vmatprep.subr.mxu0 0.0
        %1920 = vmatpush1.msra.mxu0 0.0
        %1921 = vmatprep.subr.mxu0 0.0
        %1922 = vmatpush1.msra.mxu0 0.0
        %1923 = vmatprep.subr.mxu0 0.0
        %1924 = vmatpush1.msra.mxu0 0.0
        %1925 = vmatprep.subr.mxu0 0.0
        %1926 = vmatpush1.msra.mxu0 0.0
        %1927 = vmatprep.subr.mxu0 0.0
        %1928 = vmatpush1.msra.mxu0 0.0
        %1929 = vmatprep.subr.mxu0 0.0
        %1930 = vmatpush1.msra.mxu0 0.0
        %1931 = vmatprep.subr.mxu0 0.0
        %1932 = vmatpush1.msra.mxu0 0.0
        %1933 = vmatprep.subr.mxu0 0.0
        %1934 = vmatpush1.msra.mxu0 0.0
        %1935 = vmatprep.subr.mxu0 0.0
        %1936 = vmatpush1.msra.mxu0 0.0
        %1937 = vmatprep.subr.mxu0 0.0
        %1938 = vmatpush1.msra.mxu0 0.0
        %1939 = vmatprep.subr.mxu0 0.0
        %1940 = vmatpush1.msra.mxu0 0.0
        %1941 = vmatprep.subr.mxu0 0.0
        %1942 = vmatpush1.msra.mxu0 0.0
        %1943 = vmatprep.subr.mxu0 0.0
        %1944 = vmatpush1.msra.mxu0 0.0
        %1945 = vmatprep.subr.mxu0 0.0
        %1946 = vmatpush1.msra.mxu0 0.0
        %1947 = vmatprep.subr.mxu0 0.0
        %1948 = vmatpush1.msra.mxu0 0.0
        %1949 = vmatprep.subr.mxu0 0.0
        %1950 = vmatpush1.msra.mxu0 0.0
        %1951 = vmatprep.subr.mxu0 0.0
        %1952 = vmatpush1.msra.mxu0 0.0
        %1953 = vmatprep.subr.mxu0 0.0
        %1954 = vmatpush1.msra.mxu0 0.0
        %1955 = vmatprep.subr.mxu0 0.0
        %1956 = vmatpush1.msra.mxu0 0.0
        %1957 = vmatprep.subr.mxu0 0.0
        %1958 = vmatpush1.msra.mxu0 0.0
        %1959 = vmatprep.subr.mxu0 0.0
        %1960 = vmatpush1.msra.mxu0 0.0
        %1961 = vmatprep.mubr.f32.mxu0 0.0
        %1962 = vmatmul.mubr.f32.gmra.mrb[0].mxu0 %v1895
        %v1963 = vpop.f32.mrb[0].mxu0
        %v1964 = vadd.f32 0.0, %v1963
        %v1965 = vpop.f32.mrb[0].mxu0
        %1966 = vdwg.mxu0
        %v1968 = vsel %vm547, %v1964, 0
        %1970 = vmatprep.subr.mxu0 0.0
        %1971 = vmatpush1.msra.mxu0 %v309
        %1972 = vmatprep.subr.mxu0 0.0
        %1973 = vmatpush1.msra.mxu0 0.0
        %1974 = vmatprep.subr.mxu0 0.0
        %1975 = vmatpush1.msra.mxu0 0.0
        %1976 = vmatprep.subr.mxu0 0.0
        %1977 = vmatpush1.msra.mxu0 0.0
        %1978 = vmatprep.subr.mxu0 0.0
        %1979 = vmatpush1.msra.mxu0 0.0
        %1980 = vmatprep.subr.mxu0 0.0
        %1981 = vmatpush1.msra.mxu0 0.0
        %1982 = vmatprep.subr.mxu0 0.0
        %1983 = vmatpush1.msra.mxu0 0.0
        %1984 = vmatprep.subr.mxu0 0.0
        %1985 = vmatpush1.msra.mxu0 0.0
        %1986 = vmatprep.subr.mxu0 0.0
        %1987 = vmatpush1.msra.mxu0 0.0
        %1988 = vmatprep.subr.mxu0 0.0
        %1989 = vmatpush1.msra.mxu0 0.0
        %1990 = vmatprep.subr.mxu0 0.0
        %1991 = vmatpush1.msra.mxu0 0.0
        %1992 = vmatprep.subr.mxu0 0.0
        %1993 = vmatpush1.msra.mxu0 0.0
        %1994 = vmatprep.subr.mxu0 0.0
        %1995 = vmatpush1.msra.mxu0 0.0
        %1996 = vmatprep.subr.mxu0 0.0
        %1997 = vmatpush1.msra.mxu0 0.0
        %1998 = vmatprep.subr.mxu0 0.0
        %1999 = vmatpush1.msra.mxu0 0.0
        %2000 = vmatprep.subr.mxu0 0.0
        %2001 = vmatpush1.msra.mxu0 0.0
        %2002 = vmatprep.subr.mxu0 0.0
        %2003 = vmatpush1.msra.mxu0 0.0
        %2004 = vmatprep.subr.mxu0 0.0
        %2005 = vmatpush1.msra.mxu0 0.0
        %2006 = vmatprep.subr.mxu0 0.0
        %2007 = vmatpush1.msra.mxu0 0.0
        %2008 = vmatprep.subr.mxu0 0.0
        %2009 = vmatpush1.msra.mxu0 0.0
        %2010 = vmatprep.subr.mxu0 0.0
        %2011 = vmatpush1.msra.mxu0 0.0
        %2012 = vmatprep.subr.mxu0 0.0
        %2013 = vmatpush1.msra.mxu0 0.0
        %2014 = vmatprep.subr.mxu0 0.0
        %2015 = vmatpush1.msra.mxu0 0.0
        %2016 = vmatprep.subr.mxu0 0.0
        %2017 = vmatpush1.msra.mxu0 0.0
        %2018 = vmatprep.subr.mxu0 0.0
        %2019 = vmatpush1.msra.mxu0 0.0
        %2020 = vmatprep.subr.mxu0 0.0
        %2021 = vmatpush1.msra.mxu0 0.0
        %2022 = vmatprep.subr.mxu0 0.0
        %2023 = vmatpush1.msra.mxu0 0.0
        %2024 = vmatprep.subr.mxu0 0.0
        %2025 = vmatpush1.msra.mxu0 0.0
        %2026 = vmatprep.subr.mxu0 0.0
        %2027 = vmatpush1.msra.mxu0 0.0
        %2028 = vmatprep.subr.mxu0 0.0
        %2029 = vmatpush1.msra.mxu0 0.0
        %2030 = vmatprep.subr.mxu0 0.0
        %2031 = vmatpush1.msra.mxu0 0.0
        %2032 = vmatprep.subr.mxu0 0.0
        %2033 = vmatpush1.msra.mxu0 0.0
        %2034 = vmatprep.mubr.f32.mxu0 0.0
        %2035 = vmatmul.mubr.f32.gmra.mrb[0].mxu0 %v1968
        %v2036 = vpop.f32.mrb[0].mxu0
        %v2037 = vadd.f32 0.0, %v2036
        %v2038 = vpop.f32.mrb[0].mxu0
        %2039 = vdwg.mxu0
        %v2040 = vadd.f32 %v1891, %v2037
        %v2042 = vsel %vm547, %v1601, 0
        %2044 = vmatprep.subr.mxu0 0.0
        %2045 = vmatpush1.msra.mxu0 %v1469
        %2046 = vmatprep.subr.mxu0 0.0
        %2047 = vmatpush1.msra.mxu0 0.0
        %2048 = vmatprep.subr.mxu0 0.0
        %2049 = vmatpush1.msra.mxu0 0.0
        %2050 = vmatprep.subr.mxu0 0.0
        %2051 = vmatpush1.msra.mxu0 0.0
        %2052 = vmatprep.subr.mxu0 0.0
        %2053 = vmatpush1.msra.mxu0 0.0
        %2054 = vmatprep.subr.mxu0 0.0
        %2055 = vmatpush1.msra.mxu0 0.0
        %2056 = vmatprep.subr.mxu0 0.0
        %2057 = vmatpush1.msra.mxu0 0.0
        %2058 = vmatprep.subr.mxu0 0.0
        %2059 = vmatpush1.msra.mxu0 0.0
        %2060 = vmatprep.subr.mxu0 0.0
        %2061 = vmatpush1.msra.mxu0 0.0
        %2062 = vmatprep.subr.mxu0 0.0
        %2063 = vmatpush1.msra.mxu0 0.0
        %2064 = vmatprep.subr.mxu0 0.0
        %2065 = vmatpush1.msra.mxu0 0.0
        %2066 = vmatprep.subr.mxu0 0.0
        %2067 = vmatpush1.msra.mxu0 0.0
        %2068 = vmatprep.subr.mxu0 0.0
        %2069 = vmatpush1.msra.mxu0 0.0
        %2070 = vmatprep.subr.mxu0 0.0
        %2071 = vmatpush1.msra.mxu0 0.0
        %2072 = vmatprep.subr.mxu0 0.0
        %2073 = vmatpush1.msra.mxu0 0.0
        %2074 = vmatprep.subr.mxu0 0.0
        %2075 = vmatpush1.msra.mxu0 0.0
        %2076 = vmatprep.subr.mxu0 0.0
        %2077 = vmatpush1.msra.mxu0 0.0
        %2078 = vmatprep.subr.mxu0 0.0
        %2079 = vmatpush1.msra.mxu0 0.0
        %2080 = vmatprep.subr.mxu0 0.0
        %2081 = vmatpush1.msra.mxu0 0.0
        %2082 = vmatprep.subr.mxu0 0.0
        %2083 = vmatpush1.msra.mxu0 0.0
        %2084 = vmatprep.subr.mxu0 0.0
        %2085 = vmatpush1.msra.mxu0 0.0
        %2086 = vmatprep.subr.mxu0 0.0
        %2087 = vmatpush1.msra.mxu0 0.0
        %2088 = vmatprep.subr.mxu0 0.0
        %2089 = vmatpush1.msra.mxu0 0.0
        %2090 = vmatprep.subr.mxu0 0.0
        %2091 = vmatpush1.msra.mxu0 0.0
        %2092 = vmatprep.subr.mxu0 0.0
        %2093 = vmatpush1.msra.mxu0 0.0
        %2094 = vmatprep.subr.mxu0 0.0
        %2095 = vmatpush1.msra.mxu0 0.0
        %2096 = vmatprep.subr.mxu0 0.0
        %2097 = vmatpush1.msra.mxu0 0.0
        %2098 = vmatprep.subr.mxu0 0.0
        %2099 = vmatpush1.msra.mxu0 0.0
        %2100 = vmatprep.subr.mxu0 0.0
        %2101 = vmatpush1.msra.mxu0 0.0
        %2102 = vmatprep.subr.mxu0 0.0
        %2103 = vmatpush1.msra.mxu0 0.0
        %2104 = vmatprep.subr.mxu0 0.0
        %2105 = vmatpush1.msra.mxu0 0.0
        %2106 = vmatprep.subr.mxu0 0.0
        %2107 = vmatpush1.msra.mxu0 0.0
        %2108 = vmatprep.mubr.f32.mxu0 0.0
        %2109 = vmatmul.mubr.f32.gmra.mrb[0].mxu0 %v2042
        %v2110 = vpop.f32.mrb[0].mxu0
        %v2111 = vadd.f32 0.0, %v2110
        %v2112 = vpop.f32.mrb[0].mxu0
        %2113 = vdwg.mxu0
        %v2115 = vsel %vm547, %v2111, 0
        %2117 = vmatprep.subr.mxu0 0.0
        %2118 = vmatpush1.msra.mxu0 %v310
        %2119 = vmatprep.subr.mxu0 0.0
        %2120 = vmatpush1.msra.mxu0 0.0
        %2121 = vmatprep.subr.mxu0 0.0
        %2122 = vmatpush1.msra.mxu0 0.0
        %2123 = vmatprep.subr.mxu0 0.0
        %2124 = vmatpush1.msra.mxu0 0.0
        %2125 = vmatprep.subr.mxu0 0.0
        %2126 = vmatpush1.msra.mxu0 0.0
        %2127 = vmatprep.subr.mxu0 0.0
        %2128 = vmatpush1.msra.mxu0 0.0
        %2129 = vmatprep.subr.mxu0 0.0
        %2130 = vmatpush1.msra.mxu0 0.0
        %2131 = vmatprep.subr.mxu0 0.0
        %2132 = vmatpush1.msra.mxu0 0.0
        %2133 = vmatprep.subr.mxu0 0.0
        %2134 = vmatpush1.msra.mxu0 0.0
        %2135 = vmatprep.subr.mxu0 0.0
        %2136 = vmatpush1.msra.mxu0 0.0
        %2137 = vmatprep.subr.mxu0 0.0
        %2138 = vmatpush1.msra.mxu0 0.0
        %2139 = vmatprep.subr.mxu0 0.0
        %2140 = vmatpush1.msra.mxu0 0.0
        %2141 = vmatprep.subr.mxu0 0.0
        %2142 = vmatpush1.msra.mxu0 0.0
        %2143 = vmatprep.subr.mxu0 0.0
        %2144 = vmatpush1.msra.mxu0 0.0
        %2145 = vmatprep.subr.mxu0 0.0
        %2146 = vmatpush1.msra.mxu0 0.0
        %2147 = vmatprep.subr.mxu0 0.0
        %2148 = vmatpush1.msra.mxu0 0.0
        %2149 = vmatprep.subr.mxu0 0.0
        %2150 = vmatpush1.msra.mxu0 0.0
        %2151 = vmatprep.subr.mxu0 0.0
        %2152 = vmatpush1.msra.mxu0 0.0
        %2153 = vmatprep.subr.mxu0 0.0
        %2154 = vmatpush1.msra.mxu0 0.0
        %2155 = vmatprep.subr.mxu0 0.0
        %2156 = vmatpush1.msra.mxu0 0.0
        %2157 = vmatprep.subr.mxu0 0.0
        %2158 = vmatpush1.msra.mxu0 0.0
        %2159 = vmatprep.subr.mxu0 0.0
        %2160 = vmatpush1.msra.mxu0 0.0
        %2161 = vmatprep.subr.mxu0 0.0
        %2162 = vmatpush1.msra.mxu0 0.0
        %2163 = vmatprep.subr.mxu0 0.0
        %2164 = vmatpush1.msra.mxu0 0.0
        %2165 = vmatprep.subr.mxu0 0.0
        %2166 = vmatpush1.msra.mxu0 0.0
        %2167 = vmatprep.subr.mxu0 0.0
        %2168 = vmatpush1.msra.mxu0 0.0
        %2169 = vmatprep.subr.mxu0 0.0
        %2170 = vmatpush1.msra.mxu0 0.0
        %2171 = vmatprep.subr.mxu0 0.0
        %2172 = vmatpush1.msra.mxu0 0.0
        %2173 = vmatprep.subr.mxu0 0.0
        %2174 = vmatpush1.msra.mxu0 0.0
        %2175 = vmatprep.subr.mxu0 0.0
        %2176 = vmatpush1.msra.mxu0 0.0
        %2177 = vmatprep.subr.mxu0 0.0
        %2178 = vmatpush1.msra.mxu0 0.0
        %2179 = vmatprep.subr.mxu0 0.0
        %2180 = vmatpush1.msra.mxu0 0.0
        %2181 = vmatprep.mubr.f32.mxu0 0.0
        %2182 = vmatmul.mubr.f32.gmra.mrb[0].mxu0 %v2115
        %v2183 = vpop.f32.mrb[0].mxu0
        %v2184 = vadd.f32 0.0, %v2183
        %v2185 = vpop.f32.mrb[0].mxu0
        %2186 = vdwg.mxu0
        %v2187 = vadd.f32 %v2040, %v2184
        %v2188 = vadd.f32 %v288, %v2187
        %v2189 = vlaneseq
        %v2190 = vshrl.u32 %v2189, 7
        %v2191 = vsub.s32 4, %v2190
        %v2192 = vrot.slane %v293, %v2191
        %v2193 = vadd.f32 %v2188, %v2192
        %v2194 = vmul.f32 %v2193, %v2193
        %v2195 = vsel %vm315, %v2193, 0.0
        %2196 = vadd.xlane.f32.xlu0 %v2195
        %v2197 = vpop.xlane.xlu0 %2196
        %v2198 = vsel %vm315, %v2194, 0.0
        %2199 = vadd.xlane.f32.xlu0 %v2198
        %v2200 = vpop.xlane.xlu0 %2199
        %v2201 = vrcp.pop 32.0
        %v2202 = vmul.f32 %v2197, %v2201
        %v2203 = vmul.f32 %v2200, %v2201
        %v2204 = vmul.f32 %v2202, %v2202
        %v2205 = vsub.f32 %v2203, %v2204
        %v2206 = vmax.f32 %v2205, 0.0
        %v2207 = vsub.f32 %v2193, %v2202
        %v2208 = vadd.f32 %v2206, 1e-05
        %v2209 = vrsqrt.pop %v2208
        %v2210 = vmul.f32 %v2207, %v2209
        %v2211 = vlaneseq
        %v2212 = vshrl.u32 %v2211, 7
        %v2213 = vsub.s32 5, %v2212
        %v2214 = vrot.slane %v293, %v2213
        %v2215 = vmul.f32 %v2210, %v2214
        %v2216 = vlaneseq
        %v2217 = vshrl.u32 %v2216, 7
        %v2218 = vsub.s32 6, %v2217
        %v2219 = vrot.slane %v293, %v2218
        %v2220 = vadd.f32 %v2215, %v2219
        %v2221 = vld [vmem:[%s4] sm:$0xff]
        %v2222 = vld [vmem:[%s4 + $0x8] sm:$0xff]
        %v2223 = vld [vmem:[%s4 + $0x10] sm:$0xff]
        %v2224 = vld [vmem:[%s4 + $0x18] sm:$0xff]
        %v2225 = vlaneseq
        %v2226 = vshrl.u32 %v2225, 7
        %v2227 = vsub.s32 7, %v2226
        %v2228 = vrot.slane %v293, %v2227
        %v2230 = vsel %vm315, %v2220, 0
        %2232 = vmatprep.subr.mxu0 0.0
        %2233 = vmatpush1.msra.mxu0 %v2221
        %2234 = vmatprep.subr.mxu0 0.0
        %2235 = vmatpush1.msra.mxu0 %v2222
        %2236 = vmatprep.subr.mxu0 0.0
        %2237 = vmatpush1.msra.mxu0 %v2223
        %2238 = vmatprep.subr.mxu0 0.0
        %2239 = vmatpush1.msra.mxu0 %v2224
        %2240 = vmatprep.subr.mxu0 0.0
        %2241 = vmatpush1.msra.mxu0 0.0
        %2242 = vmatprep.subr.mxu0 0.0
        %2243 = vmatpush1.msra.mxu0 0.0
        %2244 = vmatprep.subr.mxu0 0.0
        %2245 = vmatpush1.msra.mxu0 0.0
        %2246 = vmatprep.subr.mxu0 0.0
        %2247 = vmatpush1.msra.mxu0 0.0
        %2248 = vmatprep.subr.mxu0 0.0
        %2249 = vmatpush1.msra.mxu0 0.0
        %2250 = vmatprep.subr.mxu0 0.0
        %2251 = vmatpush1.msra.mxu0 0.0
        %2252 = vmatprep.subr.mxu0 0.0
        %2253 = vmatpush1.msra.mxu0 0.0
        %2254 = vmatprep.subr.mxu0 0.0
        %2255 = vmatpush1.msra.mxu0 0.0
        %2256 = vmatprep.subr.mxu0 0.0
        %2257 = vmatpush1.msra.mxu0 0.0
        %2258 = vmatprep.subr.mxu0 0.0
        %2259 = vmatpush1.msra.mxu0 0.0
        %2260 = vmatprep.subr.mxu0 0.0
        %2261 = vmatpush1.msra.mxu0 0.0
        %2262 = vmatprep.subr.mxu0 0.0
        %2263 = vmatpush1.msra.mxu0 0.0
        %2264 = vmatprep.subr.mxu0 0.0
        %2265 = vmatpush1.msra.mxu0 0.0
        %2266 = vmatprep.subr.mxu0 0.0
        %2267 = vmatpush1.msra.mxu0 0.0
        %2268 = vmatprep.subr.mxu0 0.0
        %2269 = vmatpush1.msra.mxu0 0.0
        %2270 = vmatprep.subr.mxu0 0.0
        %2271 = vmatpush1.msra.mxu0 0.0
        %2272 = vmatprep.subr.mxu0 0.0
        %2273 = vmatpush1.msra.mxu0 0.0
        %2274 = vmatprep.subr.mxu0 0.0
        %2275 = vmatpush1.msra.mxu0 0.0
        %2276 = vmatprep.subr.mxu0 0.0
        %2277 = vmatpush1.msra.mxu0 0.0
        %2278 = vmatprep.subr.mxu0 0.0
        %2279 = vmatpush1.msra.mxu0 0.0
        %2280 = vmatprep.subr.mxu0 0.0
        %2281 = vmatpush1.msra.mxu0 0.0
        %2282 = vmatprep.subr.mxu0 0.0
        %2283 = vmatpush1.msra.mxu0 0.0
        %2284 = vmatprep.subr.mxu0 0.0
        %2285 = vmatpush1.msra.mxu0 0.0
        %2286 = vmatprep.subr.mxu0 0.0
        %2287 = vmatpush1.msra.mxu0 0.0
        %2288 = vmatprep.subr.mxu0 0.0
        %2289 = vmatpush1.msra.mxu0 0.0
        %2290 = vmatprep.subr.mxu0 0.0
        %2291 = vmatpush1.msra.mxu0 0.0
        %2292 = vmatprep.subr.mxu0 0.0
        %2293 = vmatpush1.msra.mxu0 0.0
        %2294 = vmatprep.subr.mxu0 0.0
        %2295 = vmatpush1.msra.mxu0 0.0
        %2296 = vmatprep.mubr.f32.mxu0 0.0
        %2297 = vmatmul.mubr.f32.gmra.mrb[0].mxu0 %v2230
        %v2298 = vpop.f32.mrb[0].mxu0
        %v2299 = vadd.f32 %v2228, %v2298
        %v2300 = vpop.f32.mrb[0].mxu0
        %2301 = vdwg.mxu0
        %v2302 = vmax.f32 %v2299, 0.0
        %v2303 = vld [vmem:[%s5] sm:$0xff]
        %v2304 = vld [vmem:[%s5 + $0x8] sm:$0xff]
        %v2305 = vld [vmem:[%s5 + $0x10] sm:$0xff]
        %v2306 = vld [vmem:[%s5 + $0x18] sm:$0xff]
        %v2307 = vld [vmem:[%s5 + $0x20] sm:$0xff]
        %v2308 = vld [vmem:[%s5 + $0x28] sm:$0xff]
        %v2309 = vld [vmem:[%s5 + $0x30] sm:$0xff]
        %v2310 = vld [vmem:[%s5 + $0x38] sm:$0xff]
        %v2311 = vlaneseq
        %v2312 = vshrl.u32 %v2311, 7
        %v2313 = vsub.s32 0, %v2312
        %v2314 = vrot.slane %v294, %v2313
        %vm2315 = vcmask 523264
        %v2317 = vsel %vm2315, %v2302, 0
        %2319 = vmatprep.subr.mxu0 0.0
        %2320 = vmatpush1.msra.mxu0 %v2303
        %2321 = vmatprep.subr.mxu0 0.0
        %2322 = vmatpush1.msra.mxu0 %v2304
        %2323 = vmatprep.subr.mxu0 0.0
        %2324 = vmatpush1.msra.mxu0 %v2305
        %2325 = vmatprep.subr.mxu0 0.0
        %2326 = vmatpush1.msra.mxu0 %v2306
        %2327 = vmatprep.subr.mxu0 0.0
        %2328 = vmatpush1.msra.mxu0 %v2307
        %2329 = vmatprep.subr.mxu0 0.0
        %2330 = vmatpush1.msra.mxu0 %v2308
        %2331 = vmatprep.subr.mxu0 0.0
        %2332 = vmatpush1.msra.mxu0 %v2309
        %2333 = vmatprep.subr.mxu0 0.0
        %2334 = vmatpush1.msra.mxu0 %v2310
        %2335 = vmatprep.subr.mxu0 0.0
        %2336 = vmatpush1.msra.mxu0 0.0
        %2337 = vmatprep.subr.mxu0 0.0
        %2338 = vmatpush1.msra.mxu0 0.0
        %2339 = vmatprep.subr.mxu0 0.0
        %2340 = vmatpush1.msra.mxu0 0.0
        %2341 = vmatprep.subr.mxu0 0.0
        %2342 = vmatpush1.msra.mxu0 0.0
        %2343 = vmatprep.subr.mxu0 0.0
        %2344 = vmatpush1.msra.mxu0 0.0
        %2345 = vmatprep.subr.mxu0 0.0
        %2346 = vmatpush1.msra.mxu0 0.0
        %2347 = vmatprep.subr.mxu0 0.0
        %2348 = vmatpush1.msra.mxu0 0.0
        %2349 = vmatprep.subr.mxu0 0.0
        %2350 = vmatpush1.msra.mxu0 0.0
        %2351 = vmatprep.subr.mxu0 0.0
        %2352 = vmatpush1.msra.mxu0 0.0
        %2353 = vmatprep.subr.mxu0 0.0
        %2354 = vmatpush1.msra.mxu0 0.0
        %2355 = vmatprep.subr.mxu0 0.0
        %2356 = vmatpush1.msra.mxu0 0.0
        %2357 = vmatprep.subr.mxu0 0.0
        %2358 = vmatpush1.msra.mxu0 0.0
        %2359 = vmatprep.subr.mxu0 0.0
        %2360 = vmatpush1.msra.mxu0 0.0
        %2361 = vmatprep.subr.mxu0 0.0
        %2362 = vmatpush1.msra.mxu0 0.0
        %2363 = vmatprep.subr.mxu0 0.0
        %2364 = vmatpush1.msra.mxu0 0.0
        %2365 = vmatprep.subr.mxu0 0.0
        %2366 = vmatpush1.msra.mxu0 0.0
        %2367 = vmatprep.subr.mxu0 0.0
        %2368 = vmatpush1.msra.mxu0 0.0
        %2369 = vmatprep.subr.mxu0 0.0
        %2370 = vmatpush1.msra.mxu0 0.0
        %2371 = vmatprep.subr.mxu0 0.0
        %2372 = vmatpush1.msra.mxu0 0.0
        %2373 = vmatprep.subr.mxu0 0.0
        %2374 = vmatpush1.msra.mxu0 0.0
        %2375 = vmatprep.subr.mxu0 0.0
        %2376 = vmatpush1.msra.mxu0 0.0
        %2377 = vmatprep.subr.mxu0 0.0
        %2378 = vmatpush1.msra.mxu0 0.0
        %2379 = vmatprep.subr.mxu0 0.0
        %2380 = vmatpush1.msra.mxu0 0.0
        %2381 = vmatprep.subr.mxu0 0.0
        %2382 = vmatpush1.msra.mxu0 0.0
        %2383 = vmatprep.mubr.f32.mxu0 0.0
        %2384 = vmatmul.mubr.f32.gmra.mrb[0].mxu0 %v2317
        %v2385 = vpop.f32.mrb[0].mxu0
        %v2386 = vadd.f32 %v2314, %v2385
        %v2387 = vpop.f32.mrb[0].mxu0
        %2388 = vdwg.mxu0
        %v2389 = vadd.f32 %v2220, %v2386
        %v2390 = vmul.f32 %v2389, %v2389
        %v2391 = vsel %vm315, %v2389, 0.0
        %2392 = vadd.xlane.f32.xlu0 %v2391
        %v2393 = vpop.xlane.xlu0 %2392
        %v2394 = vsel %vm315, %v2390, 0.0
        %2395 = vadd.xlane.f32.xlu0 %v2394
        %v2396 = vpop.xlane.xlu0 %2395
        %v2397 = vmul.f32 %v2393, %v2201
        %v2398 = vmul.f32 %v2396, %v2201
        %v2399 = vmul.f32 %v2397, %v2397
        %v2400 = vsub.f32 %v2398, %v2399
        %v2401 = vmax.f32 %v2400, 0.0
        %v2402 = vsub.f32 %v2389, %v2397
        %v2403 = vadd.f32 %v2401, 1e-05
        %v2404 = vrsqrt.pop %v2403
        %v2405 = vmul.f32 %v2402, %v2404
        %v2406 = vlaneseq
        %v2407 = vshrl.u32 %v2406, 7
        %v2408 = vsub.s32 1, %v2407
        %v2409 = vrot.slane %v294, %v2408
        %v2410 = vmul.f32 %v2405, %v2409
        %v2411 = vlaneseq
        %v2412 = vshrl.u32 %v2411, 7
        %v2413 = vsub.s32 2, %v2412
        %v2414 = vrot.slane %v294, %v2413
        %v2415 = vadd.f32 %v2410, %v2414
        %2416 = vst.msk [vmem:[%s280] sm:$0xff] %vm315, %v2415
        %s2417 = sand.u32 %s186, 1
        %s2418 = scalar_lea.sflag [#allocation3], %s2417
        %s2419 = sand.u32 %s186, 1
        %s2420 = smul.addr %s2419, 8
        %s2421 = scalar_lea.vmem [#allocation2], %s2420
        // Predicated region
        $region49: #{tpu_custom_call.1} parent=47 // pred_check
          %p2422 = pneg %p196
        $region50: #{tpu_custom_call.1} parent=47 // pred_check_branch
          %2424 = sbr.rel (%p2422) target = $region52
        $region51: #{tpu_custom_call.1} parent=47 // pred_region
          %s2426 = ssub.s32 128, 128
          %2427 = vsyncadd %s2418, %s2426
          %s2428 = smul.addr %s21, 128
          %s2429 = scalar_lea.hbm %s7, %s2428
          %s2431 = sshll.u32 %s2421, 4
          %s2432 = int_to_ptr.vmem [resolvable:$true] %s2431
          %2434 = dma.vmem_to_hbm [thread:$0]  %s2432, 128, %s2429, %s2418
        $region52: #{tpu_custom_call.1} parent=47 // pred_fallthru
          _
      $region48: #{tpu_custom_call.1} parent=5 // pred_fallthru
        _
      %p2435 = scmp.le.s32.totalorder 2, %s16
      // Predicated region
      $region53: #{tpu_custom_call.1} parent=5 // pred_check
        %p2436 = pneg %p2435
      $region54: #{tpu_custom_call.1} parent=5 // pred_check_branch
        %2438 = sbr.rel (%p2436) target = $region56
      $region55: #{tpu_custom_call.1} parent=5 // pred_region
        %s2439 = ssub.s32 %s16, 2
        // Predicated region
        $region57: #{tpu_custom_call.1} parent=55 // pred_check
          %p2440 = pneg %p202
        $region58: #{tpu_custom_call.1} parent=55 // pred_check_branch
          %2442 = sbr.rel (%p2440) target = $region60
        $region59: #{tpu_custom_call.1} parent=55 // pred_region
          %s2443 = sand.u32 %s187, 1
          %s2444 = scalar_lea.sflag [#allocation3], %s2443
          %s2445 = sand.u32 %s187, 1
          %s2446 = smul.addr %s2445, 8
          %s2447 = scalar_lea.vmem [#allocation2], %s2446
          %2448 = dma.done %s2444, 128
        $region60: #{tpu_custom_call.1} parent=55 // pred_fallthru
          _
      $region56: #{tpu_custom_call.1} parent=5 // pred_fallthru
        _
    $region6: #{tpu_custom_call.1} parent=1 // loop_footer
      %s20 = sadd.s32 1, %s16
    $region7: #{tpu_custom_call.1} parent=1 // loop_footer_branch
      %15 = sbr.rel target = $region3
    $region8: #{tpu_custom_call.1} parent=1 // loop_exit
      _
    %2449 = vsyncpa [#allocation3], 1
    %s2450 = scalar_lea.sflag [#allocation3], 1
    %2451 = vsyncpa %s2450, 1

</llo_original>
